<compile_context>
chip_gen: v7x
topology: tpu7x:2x2x1
jax: 0.10.0
libtpu: 0.0.40
codegen_flags: <defaults>
</compile_context>

<pallas_src>
import functools

import jax
import jax.numpy as jnp
from jax.experimental import pallas as pl
from jax.experimental.pallas import tpu as pltpu

LN_EPS = 1e-5
_NEG_INF = -1e30

# Rows inside the padded (16, NFB) bias / LayerNorm bank.  Rows used together are kept
# within the same 8-sublane tile.
_B_EMB, _G_EMB, _BE_EMB = 0, 1, 2          # embedding bias + LayerNorm gamma/beta
_BQ, _BK, _BV, _BO = 3, 4, 5, 6            # attention projection biases      (tile 0)
_G1, _B1 = 8, 9                            # post-attention LayerNorm
_B_FF1, _B_FF2 = 10, 11                    # FFN biases
_G2, _B2 = 12, 13                          # post-FFN LayerNorm               (tile 1)
_VEC_ROWS = 16

# Slices inside the consolidated (6, NFB, NFB) weight bank.
_WQ, _WK, _WV, _WO, _WFF1, _WFF2 = 0, 1, 2, 3, 4, 5


def _layernorm(x, gamma, beta):
    mu = jnp.mean(x, axis=-1, keepdims=True)
    var = jnp.mean((x - mu) ** 2, axis=-1, keepdims=True)
    return (x - mu) * jax.lax.rsqrt(var + LN_EPS) * gamma + beta


def _mm(a, w):
    """bf16 MXU matmul with f32 accumulation (astype is a no-op for bf16 operands)."""
    return jnp.dot(a.astype(jnp.bfloat16), w.astype(jnp.bfloat16),
                   preferred_element_type=jnp.float32)


def at_kernel(x_ref, w_emb_ref, w_bank_ref, vec_ref, bias_ref, sel_ref, out_ref,
              *, n_actors):
    N = n_actors
    bf16 = jnp.bfloat16
    f32 = jnp.float32

    x = x_ref[0]                    # (M, C) bf16, group-major rows: m = g*N + n
    vec = vec_ref[...]              # (16, NFB) f32

    def row(i):
        return vec[i:i + 1]

    # fc_emb_1 -> LayerNorm -> ReLU                                        (M, F) f32
    emb = _mm(x, w_emb_ref[...]) + row(_B_EMB)
    emb = _layernorm(emb, row(_G_EMB), row(_BE_EMB))
    emb = jnp.maximum(emb, 0.0)
    emb_bf = emb.astype(bf16)       # cast once; reused by the q/k/v projections

    # Single-head self-attention restricted to each group of N actor rows.  The
    # block-diagonal structure comes from the precomputed additive bias operand;
    # the 1/sqrt(NFB) scale is folded into w_q / b_q at init, so the (M, M) score
    # matrix is never scaled elementwise here.
    q = _mm(emb_bf, w_bank_ref[_WQ]) + row(_BQ)
    k = _mm(emb_bf, w_bank_ref[_WK]) + row(_BK)
    v = _mm(emb_bf, w_bank_ref[_WV]) + row(_BV)
    scores = jax.lax.dot_general(   # q @ k.T without materialising a transpose
        q.astype(bf16), k.astype(bf16),
        dimension_numbers=(((1,), (1,)), ((), ())),
        preferred_element_type=f32) + bias_ref[...]                        # (M, M)
    scores = scores - jnp.max(scores, axis=-1, keepdims=True)
    p = jnp.exp(scores)             # cross-group entries underflow to exactly 0
    attn = p * pl.reciprocal(jnp.sum(p, axis=-1, keepdims=True), approx=True)
    att = _mm(attn, v)
    att = _mm(att, w_bank_ref[_WO]) + row(_BO)

    # Post-norm transformer encoder layer (eval mode -> dropout is identity).
    src = _layernorm(emb + att, row(_G1), row(_B1))
    src_bf = src.astype(bf16)
    ff = jnp.maximum(_mm(src_bf, w_bank_ref[_WFF1]) + row(_B_FF1), 0.0)
    ff = _mm(ff, w_bank_ref[_WFF2]) + row(_B_FF2)
    src = _layernorm(src + ff, row(_G2), row(_B2))                         # (M, F) f32

    # Max-pool over the N actors of each group -> (G, F): precomputed bf16 one-hot
    # row-selector bank -> N tiny bf16 MXU matmuls + elementwise max.
    src_bf = src.astype(bf16)
    pooled = _mm(sel_ref[0], src_bf)
    for n in range(1, N):
        pooled = jnp.maximum(pooled, _mm(sel_ref[n], src_bf))
    out_ref[0] = pooled


def _choose_grouping(bt, n_actors, target_rows):
    """(b, t) groups per grid step G, and padded grid length S (BT_pad = S * G)."""
    g = max(1, min(target_rows // max(n_actors, 1), bt))
    s = -(-bt // g)                 # ceil div; padding handled by the wrapper
    if s > 1 and s % 2 == 1:
        s += 1                      # v7x: 2 TensorCores -> even "parallel" grid axis
    return g, s


def _estimate_vmem_bytes(m, c, nfi, nfb, g, n, weight_bufs):
    in_bytes = 2 * m * c * 2                               # x block (bf16), double-buffered
    out_bytes = 2 * g * nfb * 4                            # pooled block (f32), double-buffered
    const_bytes = weight_bufs * (nfi * nfb * 2             # w_emb      (bf16)
                                 + 6 * nfb * nfb * 2       # w_bank     (bf16)
                                 + _VEC_ROWS * nfb * 4     # vec_bank   (f32)
                                 + m * m * 4               # attn bias  (f32)
                                 + n * g * m * 2)          # pool selectors (bf16)
    act_bytes = 14 * m * nfb * 4 + 3 * m * m * 4           # live f32 intermediates (generous)
    return in_bytes + out_bytes + const_bytes + act_bytes


def init_params(key, nfi, nfb, num_classes):
    ks = jax.random.split(key, 8)

    def kaiming(k, fan_in, shape):
        return jax.random.normal(k, shape, jnp.float32) * jnp.sqrt(2.0 / fan_in)

    w_emb = kaiming(ks[0], nfi, (nfi, nfb))
    # Fold the 1/sqrt(NFB) attention scale into the query projection (bias is zero at
    # init; a nonzero b_q would have to be pre-scaled the same way).
    wq = kaiming(ks[1], nfb, (nfb, nfb)) * (1.0 / float(nfb) ** 0.5)
    wk = kaiming(ks[2], nfb, (nfb, nfb))
    wv = kaiming(ks[3], nfb, (nfb, nfb))
    wo = kaiming(ks[4], nfb, (nfb, nfb))
    w_ff1 = kaiming(ks[5], nfb, (nfb, nfb))                # dim_feedforward = NFB
    w_ff2 = kaiming(ks[6], nfb, (nfb, nfb))
    w_act = kaiming(ks[7], nfb, (nfb, num_classes))

    vec_bank = jnp.zeros((_VEC_ROWS, nfb), jnp.float32)    # padded to a full sublane tile
    vec_bank = vec_bank.at[_G_EMB].set(1.0).at[_G1].set(1.0).at[_G2].set(1.0)

    return {
        # bf16 copies feed the MXU (halves weight DMA); accumulation stays f32.
        "w_emb": w_emb.astype(jnp.bfloat16),                                   # (NFI, NFB)
        "w_bank": jnp.stack([wq, wk, wv, wo, w_ff1, w_ff2]).astype(jnp.bfloat16),  # (6,NFB,NFB)
        "vec_bank": vec_bank,            # biases + LayerNorm gamma/beta, f32  # (16, NFB)
        "w_act": w_act,                  # classifier stays in XLA
        "b_act": jnp.zeros((num_classes,), jnp.float32),
    }


def at_forward(boxes_features, params, *, target_rows=128, single_buffer_weights=False):
    """boxes_features: (B, N, T, C) — same layout the PyTorch module receives."""
    B, N, T, C = boxes_features.shape
    nfi = params["w_emb"].shape[0]
    nfb = params["w_bank"].shape[-1]
    num_classes = params["w_act"].shape[-1]
    BT = B * T

    G, S = _choose_grouping(BT, N, target_rows)
    M = G * N
    BT_pad = S * G

    # One relayout pass: (B, N, T, C) -> (B, T, N, C) -> (S, G*N, C) group-major slabs.
    # Padded groups are all-zero; they compute harmless zeros and are sliced off below.
    x = jnp.transpose(boxes_features, (0, 2, 1, 3)).reshape(BT, N, C)
    if BT_pad != BT:
        x = jnp.concatenate([x, jnp.zeros((BT_pad - BT, N, C), x.dtype)], axis=0)
    x = x.reshape(S, M, C).astype(jnp.bfloat16)   # MXU operand; halves input DMA bytes

    # Grid-step-invariant operands precomputed once (mask bias + pooling selectors).
    r = jnp.arange(M)
    attn_bias = jnp.where((r[:, None] // N) == (r[None, :] // N),
                          0.0, _NEG_INF).astype(jnp.float32)               # (M, M)
    sel = (r[None, None, :] ==
           (jnp.arange(G)[None, :, None] * N + jnp.arange(N)[:, None, None]))
    sel = sel.astype(jnp.bfloat16)                                          # (N, G, M)

    const_kwargs = {}
    if single_buffer_weights:
        # v7x / large NFB: do not double-buffer operands whose block index never changes
        # (reclaims VMEM under the 64 MiB/TC ceiling).
        const_kwargs = dict(pipeline_mode=pl.Buffered(1))

    vmem_est = _estimate_vmem_bytes(M, C, nfi, nfb, G, N,
                                    1 if single_buffer_weights else 2)
    vmem_limit = int(min(64 * 1024 * 1024, max(16 * 1024 * 1024, 2 * vmem_est)))

    kernel = functools.partial(at_kernel, n_actors=N)
    pooled = pl.pallas_call(
        kernel,
        out_shape=jax.ShapeDtypeStruct((S, G, nfb), jnp.float32),
        grid=(S,),
        in_specs=[
            pl.BlockSpec((1, M, C), lambda i: (i, 0, 0)),
            pl.BlockSpec(params["w_emb"].shape, lambda i: (0, 0), **const_kwargs),
            pl.BlockSpec(params["w_bank"].shape, lambda i: (0, 0, 0), **const_kwargs),
            pl.BlockSpec(params["vec_bank"].shape, lambda i: (0, 0), **const_kwargs),
            pl.BlockSpec((M, M), lambda i: (0, 0), **const_kwargs),
            pl.BlockSpec((N, G, M), lambda i: (0, 0, 0), **const_kwargs),
        ],
        out_specs=pl.BlockSpec((1, G, nfb), lambda i: (i, 0, 0)),
        compiler_params=pltpu.CompilerParams(
            dimension_semantics=("parallel",),   # shards the group axis across TCs (v7x)
            vmem_limit_bytes=vmem_limit,
        ),
    )(x, params["w_emb"], params["w_bank"], params["vec_bank"], attn_bias, sel)

    # Tiny classifier + temporal mean in plain XLA: keeps the kernel output lane-dense
    # (last dim NFB) instead of a masked num_classes=8 store.
    pooled = pooled.reshape(BT_pad, nfb)[:BT]
    logits = pooled @ params["w_act"] + params["b_act"]             # (BT, num_classes)
    return jnp.mean(logits.reshape(B, T, num_classes), axis=1)      # (B, num_classes)


if __name__ == "__main__":
    B, N, T = 2, 4, 3
    NFI, NFB, NUM_CLASSES = 32, 128, 8   # NFB chosen as a lane multiple (perf item 7)

    key = jax.random.PRNGKey(0)
    k_in, k_par = jax.random.split(key)
    boxes_features = jax.random.normal(k_in, (B, N, T, NFI), jnp.float32)
    params = init_params(k_par, NFI, NFB, NUM_CLASSES)

    scores = jax.jit(at_forward)(boxes_features, params)
    scores = jax.block_until_ready(scores)
    assert scores.shape == (B, NUM_CLASSES)
    print("KERNEL_OK")
</pallas_src>

<mosaic_0001>
module attributes {stable_mosaic.version = 11 : i64} {
  func.func @at_kernel(%arg0: i32, %arg1: memref<1x24x32xbf16, #tpu.memory_space<vmem>>, %arg2: memref<32x128xbf16, #tpu.memory_space<vmem>>, %arg3: memref<6x128x128xbf16, #tpu.memory_space<vmem>>, %arg4: memref<16x128xf32, #tpu.memory_space<vmem>>, %arg5: memref<24x24xf32, #tpu.memory_space<vmem>>, %arg6: memref<4x6x24xbf16, #tpu.memory_space<vmem>>, %arg7: memref<1x6x128xf32, #tpu.memory_space<vmem>>) attributes {dimension_semantics = [#tpu.dimension_semantics<parallel>], iteration_bounds = array<i64: 1>, scalar_prefetch = 0 : i64, scratch_operands = 0 : i64, tpu.core_type = #tpu.core_type<tc>, window_params = [{transform_indices = @transform_0, window_bounds = array<i64: 1, 24, 32>}, {pipeline_mode = #tpu.pipeline_mode<synchronous>, transform_indices = @transform_1, window_bounds = array<i64: 32, 128>}, {pipeline_mode = #tpu.pipeline_mode<synchronous>, transform_indices = @transform_2, window_bounds = array<i64: 6, 128, 128>}, {pipeline_mode = #tpu.pipeline_mode<synchronous>, transform_indices = @transform_3, window_bounds = array<i64: 16, 128>}, {pipeline_mode = #tpu.pipeline_mode<synchronous>, transform_indices = @transform_4, window_bounds = array<i64: 24, 24>}, {pipeline_mode = #tpu.pipeline_mode<synchronous>, transform_indices = @transform_5, window_bounds = array<i64: 4, 6, 24>}, {transform_indices = @transform_6, window_bounds = array<i64: 1, 6, 128>}]} {
    %c0 = arith.constant 0 : index
    %c0_0 = arith.constant 0 : index
    %c0_1 = arith.constant 0 : index
    %0 = vector.load %arg1[%c0, %c0_0, %c0_1] : memref<1x24x32xbf16, #tpu.memory_space<vmem>>, vector<1x24x32xbf16>
    %1 = vector.shape_cast %0 : vector<1x24x32xbf16> to vector<24x32xbf16>
    %c0_2 = arith.constant 0 : index
    %c0_3 = arith.constant 0 : index
    %2 = vector.load %arg4[%c0_2, %c0_3] : memref<16x128xf32, #tpu.memory_space<vmem>>, vector<16x128xf32>
    %c0_4 = arith.constant 0 : index
    %c0_5 = arith.constant 0 : index
    %3 = vector.load %arg2[%c0_4, %c0_5] : memref<32x128xbf16, #tpu.memory_space<vmem>>, vector<32x128xbf16>
    %cst = arith.constant dense<0.000000e+00> : vector<24x128xf32>
    %4 = tpu.matmul %1, %3, %cst {dimension_numbers = #tpu.dot_dimension_numbers<[1], [0], [0], [1], [0, 0, 1, 1], [], []>} : vector<24x32xbf16>, vector<32x128xbf16>, vector<24x128xf32> -> vector<24x128xf32>
    %5 = vector.extract_strided_slice %2 {offsets = [0, 0], sizes = [1, 128], strides = [1, 1]} : vector<16x128xf32> to vector<1x128xf32>
    %6 = vector.broadcast %5 : vector<1x128xf32> to vector<24x128xf32>
    %7 = arith.addf %4, %6 : vector<24x128xf32>
    %8 = vector.extract_strided_slice %2 {offsets = [1, 0], sizes = [1, 128], strides = [1, 1]} : vector<16x128xf32> to vector<1x128xf32>
    %9 = vector.extract_strided_slice %2 {offsets = [2, 0], sizes = [1, 128], strides = [1, 1]} : vector<16x128xf32> to vector<1x128xf32>
    %cst_6 = arith.constant dense<0.000000e+00> : vector<24xf32>
    %10 = vector.multi_reduction <add>, %7, %cst_6 [1] : vector<24x128xf32> to vector<24xf32>
    %11 = vector.shape_cast %10 : vector<24xf32> to vector<24x1xf32>
    %cst_7 = arith.constant 1.280000e+02 : f32
    %12 = vector.broadcast %cst_7 : f32 to vector<24x1xf32>
    %13 = arith.divf %11, %12 : vector<24x1xf32>
    %14 = vector.broadcast %13 : vector<24x1xf32> to vector<24x128xf32>
    %15 = arith.subf %7, %14 : vector<24x128xf32>
    %16 = arith.mulf %15, %15 : vector<24x128xf32>
    %cst_8 = arith.constant dense<0.000000e+00> : vector<24xf32>
    %17 = vector.multi_reduction <add>, %16, %cst_8 [1] : vector<24x128xf32> to vector<24xf32>
    %18 = vector.shape_cast %17 : vector<24xf32> to vector<24x1xf32>
    %cst_9 = arith.constant 1.280000e+02 : f32
    %19 = vector.broadcast %cst_9 : f32 to vector<24x1xf32>
    %20 = arith.divf %18, %19 : vector<24x1xf32>
    %21 = vector.broadcast %13 : vector<24x1xf32> to vector<24x128xf32>
    %22 = arith.subf %7, %21 : vector<24x128xf32>
    %cst_10 = arith.constant 9.99999974E-6 : f32
    %23 = vector.broadcast %cst_10 : f32 to vector<24x1xf32>
    %24 = arith.addf %20, %23 : vector<24x1xf32>
    %25 = math.rsqrt %24 : vector<24x1xf32>
    %26 = vector.broadcast %25 : vector<24x1xf32> to vector<24x128xf32>
    %27 = arith.mulf %22, %26 : vector<24x128xf32>
    %28 = vector.broadcast %8 : vector<1x128xf32> to vector<24x128xf32>
    %29 = arith.mulf %27, %28 : vector<24x128xf32>
    %30 = vector.broadcast %9 : vector<1x128xf32> to vector<24x128xf32>
    %31 = arith.addf %29, %30 : vector<24x128xf32>
    %cst_11 = arith.constant 0.000000e+00 : f32
    %32 = vector.broadcast %cst_11 : f32 to vector<24x128xf32>
    %33 = arith.maximumf %31, %32 : vector<24x128xf32>
    %34 = arith.truncf %33 : vector<24x128xf32> to vector<24x128xbf16>
    %c0_12 = arith.constant 0 : index
    %c0_13 = arith.constant 0 : index
    %c0_14 = arith.constant 0 : index
    %35 = vector.load %arg3[%c0_12, %c0_13, %c0_14] : memref<6x128x128xbf16, #tpu.memory_space<vmem>>, vector<1x128x128xbf16>
    %36 = vector.shape_cast %35 : vector<1x128x128xbf16> to vector<128x128xbf16>
    %cst_15 = arith.constant dense<0.000000e+00> : vector<24x128xf32>
    %37 = tpu.matmul %34, %36, %cst_15 {dimension_numbers = #tpu.dot_dimension_numbers<[1], [0], [0], [1], [0, 0, 1, 1], [], []>} : vector<24x128xbf16>, vector<128x128xbf16>, vector<24x128xf32> -> vector<24x128xf32>
    %38 = vector.extract_strided_slice %2 {offsets = [3, 0], sizes = [1, 128], strides = [1, 1]} : vector<16x128xf32> to vector<1x128xf32>
    %39 = vector.broadcast %38 : vector<1x128xf32> to vector<24x128xf32>
    %40 = arith.addf %37, %39 : vector<24x128xf32>
    %c1 = arith.constant 1 : index
    %c0_16 = arith.constant 0 : index
    %c0_17 = arith.constant 0 : index
    %41 = vector.load %arg3[%c1, %c0_16, %c0_17] : memref<6x128x128xbf16, #tpu.memory_space<vmem>>, vector<1x128x128xbf16>
    %42 = vector.shape_cast %41 : vector<1x128x128xbf16> to vector<128x128xbf16>
    %cst_18 = arith.constant dense<0.000000e+00> : vector<24x128xf32>
    %43 = tpu.matmul %34, %42, %cst_18 {dimension_numbers = #tpu.dot_dimension_numbers<[1], [0], [0], [1], [0, 0, 1, 1], [], []>} : vector<24x128xbf16>, vector<128x128xbf16>, vector<24x128xf32> -> vector<24x128xf32>
    %44 = vector.extract_strided_slice %2 {offsets = [4, 0], sizes = [1, 128], strides = [1, 1]} : vector<16x128xf32> to vector<1x128xf32>
    %45 = vector.broadcast %44 : vector<1x128xf32> to vector<24x128xf32>
    %46 = arith.addf %43, %45 : vector<24x128xf32>
    %c2 = arith.constant 2 : index
    %c0_19 = arith.constant 0 : index
    %c0_20 = arith.constant 0 : index
    %47 = vector.load %arg3[%c2, %c0_19, %c0_20] : memref<6x128x128xbf16, #tpu.memory_space<vmem>>, vector<1x128x128xbf16>
    %48 = vector.shape_cast %47 : vector<1x128x128xbf16> to vector<128x128xbf16>
    %cst_21 = arith.constant dense<0.000000e+00> : vector<24x128xf32>
    %49 = tpu.matmul %34, %48, %cst_21 {dimension_numbers = #tpu.dot_dimension_numbers<[1], [0], [0], [1], [0, 0, 1, 1], [], []>} : vector<24x128xbf16>, vector<128x128xbf16>, vector<24x128xf32> -> vector<24x128xf32>
    %50 = vector.extract_strided_slice %2 {offsets = [5, 0], sizes = [1, 128], strides = [1, 1]} : vector<16x128xf32> to vector<1x128xf32>
    %51 = vector.broadcast %50 : vector<1x128xf32> to vector<24x128xf32>
    %52 = arith.addf %49, %51 : vector<24x128xf32>
    %53 = arith.truncf %40 : vector<24x128xf32> to vector<24x128xbf16>
    %54 = arith.truncf %46 : vector<24x128xf32> to vector<24x128xbf16>
    %cst_22 = arith.constant dense<0.000000e+00> : vector<24x24xf32>
    %55 = tpu.matmul %53, %54, %cst_22 {dimension_numbers = #tpu.dot_dimension_numbers<[1], [1], [0], [0], [0, 0, 1, 0], [], []>} : vector<24x128xbf16>, vector<24x128xbf16>, vector<24x24xf32> -> vector<24x24xf32>
    %c0_23 = arith.constant 0 : index
    %c0_24 = arith.constant 0 : index
    %56 = vector.load %arg5[%c0_23, %c0_24] : memref<24x24xf32, #tpu.memory_space<vmem>>, vector<24x24xf32>
    %57 = arith.addf %55, %56 : vector<24x24xf32>
    %cst_25 = arith.constant dense<0xFF800000> : vector<24xf32>
    %58 = vector.multi_reduction <maximumf>, %57, %cst_25 [1] : vector<24x24xf32> to vector<24xf32>
    %59 = vector.shape_cast %58 : vector<24xf32> to vector<24x1xf32>
    %60 = vector.broadcast %59 : vector<24x1xf32> to vector<24x24xf32>
    %61 = arith.subf %57, %60 : vector<24x24xf32>
    %62 = math.exp %61 : vector<24x24xf32>
    %cst_26 = arith.constant dense<0.000000e+00> : vector<24xf32>
    %63 = vector.multi_reduction <add>, %62, %cst_26 [1] : vector<24x24xf32> to vector<24xf32>
    %64 = vector.shape_cast %63 : vector<24xf32> to vector<24x1xf32>
    %65 = tpu.reciprocal %64 {approx = true} : vector<24x1xf32> -> vector<24x1xf32>
    %66 = vector.broadcast %65 : vector<24x1xf32> to vector<24x24xf32>
    %67 = arith.mulf %62, %66 : vector<24x24xf32>
    %68 = arith.truncf %67 : vector<24x24xf32> to vector<24x24xbf16>
    %69 = arith.truncf %52 : vector<24x128xf32> to vector<24x128xbf16>
    %cst_27 = arith.constant dense<0.000000e+00> : vector<24x128xf32>
    %70 = tpu.matmul %68, %69, %cst_27 {dimension_numbers = #tpu.dot_dimension_numbers<[1], [0], [0], [1], [0, 0, 1, 1], [], []>} : vector<24x24xbf16>, vector<24x128xbf16>, vector<24x128xf32> -> vector<24x128xf32>
    %c3 = arith.constant 3 : index
    %c0_28 = arith.constant 0 : index
    %c0_29 = arith.constant 0 : index
    %71 = vector.load %arg3[%c3, %c0_28, %c0_29] : memref<6x128x128xbf16, #tpu.memory_space<vmem>>, vector<1x128x128xbf16>
    %72 = vector.shape_cast %71 : vector<1x128x128xbf16> to vector<128x128xbf16>
    %73 = arith.truncf %70 : vector<24x128xf32> to vector<24x128xbf16>
    %cst_30 = arith.constant dense<0.000000e+00> : vector<24x128xf32>
    %74 = tpu.matmul %73, %72, %cst_30 {dimension_numbers = #tpu.dot_dimension_numbers<[1], [0], [0], [1], [0, 0, 1, 1], [], []>} : vector<24x128xbf16>, vector<128x128xbf16>, vector<24x128xf32> -> vector<24x128xf32>
    %75 = vector.extract_strided_slice %2 {offsets = [6, 0], sizes = [1, 128], strides = [1, 1]} : vector<16x128xf32> to vector<1x128xf32>
    %76 = vector.broadcast %75 : vector<1x128xf32> to vector<24x128xf32>
    %77 = arith.addf %74, %76 : vector<24x128xf32>
    %78 = arith.addf %33, %77 : vector<24x128xf32>
    %79 = vector.extract_strided_slice %2 {offsets = [8, 0], sizes = [1, 128], strides = [1, 1]} : vector<16x128xf32> to vector<1x128xf32>
    %80 = vector.extract_strided_slice %2 {offsets = [9, 0], sizes = [1, 128], strides = [1, 1]} : vector<16x128xf32> to vector<1x128xf32>
    %cst_31 = arith.constant dense<0.000000e+00> : vector<24xf32>
    %81 = vector.multi_reduction <add>, %78, %cst_31 [1] : vector<24x128xf32> to vector<24xf32>
    %82 = vector.shape_cast %81 : vector<24xf32> to vector<24x1xf32>
    %cst_32 = arith.constant 1.280000e+02 : f32
    %83 = vector.broadcast %cst_32 : f32 to vector<24x1xf32>
    %84 = arith.divf %82, %83 : vector<24x1xf32>
    %85 = vector.broadcast %84 : vector<24x1xf32> to vector<24x128xf32>
    %86 = arith.subf %78, %85 : vector<24x128xf32>
    %87 = arith.mulf %86, %86 : vector<24x128xf32>
    %cst_33 = arith.constant dense<0.000000e+00> : vector<24xf32>
    %88 = vector.multi_reduction <add>, %87, %cst_33 [1] : vector<24x128xf32> to vector<24xf32>
    %89 = vector.shape_cast %88 : vector<24xf32> to vector<24x1xf32>
    %cst_34 = arith.constant 1.280000e+02 : f32
    %90 = vector.broadcast %cst_34 : f32 to vector<24x1xf32>
    %91 = arith.divf %89, %90 : vector<24x1xf32>
    %92 = vector.broadcast %84 : vector<24x1xf32> to vector<24x128xf32>
    %93 = arith.subf %78, %92 : vector<24x128xf32>
    %cst_35 = arith.constant 9.99999974E-6 : f32
    %94 = vector.broadcast %cst_35 : f32 to vector<24x1xf32>
    %95 = arith.addf %91, %94 : vector<24x1xf32>
    %96 = math.rsqrt %95 : vector<24x1xf32>
    %97 = vector.broadcast %96 : vector<24x1xf32> to vector<24x128xf32>
    %98 = arith.mulf %93, %97 : vector<24x128xf32>
    %99 = vector.broadcast %79 : vector<1x128xf32> to vector<24x128xf32>
    %100 = arith.mulf %98, %99 : vector<24x128xf32>
    %101 = vector.broadcast %80 : vector<1x128xf32> to vector<24x128xf32>
    %102 = arith.addf %100, %101 : vector<24x128xf32>
    %103 = arith.truncf %102 : vector<24x128xf32> to vector<24x128xbf16>
    %c4 = arith.constant 4 : index
    %c0_36 = arith.constant 0 : index
    %c0_37 = arith.constant 0 : index
    %104 = vector.load %arg3[%c4, %c0_36, %c0_37] : memref<6x128x128xbf16, #tpu.memory_space<vmem>>, vector<1x128x128xbf16>
    %105 = vector.shape_cast %104 : vector<1x128x128xbf16> to vector<128x128xbf16>
    %cst_38 = arith.constant dense<0.000000e+00> : vector<24x128xf32>
    %106 = tpu.matmul %103, %105, %cst_38 {dimension_numbers = #tpu.dot_dimension_numbers<[1], [0], [0], [1], [0, 0, 1, 1], [], []>} : vector<24x128xbf16>, vector<128x128xbf16>, vector<24x128xf32> -> vector<24x128xf32>
    %107 = vector.extract_strided_slice %2 {offsets = [10, 0], sizes = [1, 128], strides = [1, 1]} : vector<16x128xf32> to vector<1x128xf32>
    %108 = vector.broadcast %107 : vector<1x128xf32> to vector<24x128xf32>
    %109 = arith.addf %106, %108 : vector<24x128xf32>
    %cst_39 = arith.constant 0.000000e+00 : f32
    %110 = vector.broadcast %cst_39 : f32 to vector<24x128xf32>
    %111 = arith.maximumf %109, %110 : vector<24x128xf32>
    %c5 = arith.constant 5 : index
    %c0_40 = arith.constant 0 : index
    %c0_41 = arith.constant 0 : index
    %112 = vector.load %arg3[%c5, %c0_40, %c0_41] : memref<6x128x128xbf16, #tpu.memory_space<vmem>>, vector<1x128x128xbf16>
    %113 = vector.shape_cast %112 : vector<1x128x128xbf16> to vector<128x128xbf16>
    %114 = arith.truncf %111 : vector<24x128xf32> to vector<24x128xbf16>
    %cst_42 = arith.constant dense<0.000000e+00> : vector<24x128xf32>
    %115 = tpu.matmul %114, %113, %cst_42 {dimension_numbers = #tpu.dot_dimension_numbers<[1], [0], [0], [1], [0, 0, 1, 1], [], []>} : vector<24x128xbf16>, vector<128x128xbf16>, vector<24x128xf32> -> vector<24x128xf32>
    %116 = vector.extract_strided_slice %2 {offsets = [11, 0], sizes = [1, 128], strides = [1, 1]} : vector<16x128xf32> to vector<1x128xf32>
    %117 = vector.broadcast %116 : vector<1x128xf32> to vector<24x128xf32>
    %118 = arith.addf %115, %117 : vector<24x128xf32>
    %119 = arith.addf %102, %118 : vector<24x128xf32>
    %120 = vector.extract_strided_slice %2 {offsets = [12, 0], sizes = [1, 128], strides = [1, 1]} : vector<16x128xf32> to vector<1x128xf32>
    %121 = vector.extract_strided_slice %2 {offsets = [13, 0], sizes = [1, 128], strides = [1, 1]} : vector<16x128xf32> to vector<1x128xf32>
    %cst_43 = arith.constant dense<0.000000e+00> : vector<24xf32>
    %122 = vector.multi_reduction <add>, %119, %cst_43 [1] : vector<24x128xf32> to vector<24xf32>
    %123 = vector.shape_cast %122 : vector<24xf32> to vector<24x1xf32>
    %cst_44 = arith.constant 1.280000e+02 : f32
    %124 = vector.broadcast %cst_44 : f32 to vector<24x1xf32>
    %125 = arith.divf %123, %124 : vector<24x1xf32>
    %126 = vector.broadcast %125 : vector<24x1xf32> to vector<24x128xf32>
    %127 = arith.subf %119, %126 : vector<24x128xf32>
    %128 = arith.mulf %127, %127 : vector<24x128xf32>
    %cst_45 = arith.constant dense<0.000000e+00> : vector<24xf32>
    %129 = vector.multi_reduction <add>, %128, %cst_45 [1] : vector<24x128xf32> to vector<24xf32>
    %130 = vector.shape_cast %129 : vector<24xf32> to vector<24x1xf32>
    %cst_46 = arith.constant 1.280000e+02 : f32
    %131 = vector.broadcast %cst_46 : f32 to vector<24x1xf32>
    %132 = arith.divf %130, %131 : vector<24x1xf32>
    %133 = vector.broadcast %125 : vector<24x1xf32> to vector<24x128xf32>
    %134 = arith.subf %119, %133 : vector<24x128xf32>
    %cst_47 = arith.constant 9.99999974E-6 : f32
    %135 = vector.broadcast %cst_47 : f32 to vector<24x1xf32>
    %136 = arith.addf %132, %135 : vector<24x1xf32>
    %137 = math.rsqrt %136 : vector<24x1xf32>
    %138 = vector.broadcast %137 : vector<24x1xf32> to vector<24x128xf32>
    %139 = arith.mulf %134, %138 : vector<24x128xf32>
    %140 = vector.broadcast %120 : vector<1x128xf32> to vector<24x128xf32>
    %141 = arith.mulf %139, %140 : vector<24x128xf32>
    %142 = vector.broadcast %121 : vector<1x128xf32> to vector<24x128xf32>
    %143 = arith.addf %141, %142 : vector<24x128xf32>
    %144 = arith.truncf %143 : vector<24x128xf32> to vector<24x128xbf16>
    %c0_48 = arith.constant 0 : index
    %c0_49 = arith.constant 0 : index
    %c0_50 = arith.constant 0 : index
    %145 = vector.load %arg6[%c0_48, %c0_49, %c0_50] : memref<4x6x24xbf16, #tpu.memory_space<vmem>>, vector<1x6x24xbf16>
    %146 = vector.shape_cast %145 : vector<1x6x24xbf16> to vector<6x24xbf16>
    %cst_51 = arith.constant dense<0.000000e+00> : vector<6x128xf32>
    %147 = tpu.matmul %146, %144, %cst_51 {dimension_numbers = #tpu.dot_dimension_numbers<[1], [0], [0], [1], [0, 0, 1, 1], [], []>} : vector<6x24xbf16>, vector<24x128xbf16>, vector<6x128xf32> -> vector<6x128xf32>
    %c1_52 = arith.constant 1 : index
    %c0_53 = arith.constant 0 : index
    %c0_54 = arith.constant 0 : index
    %148 = vector.load %arg6[%c1_52, %c0_53, %c0_54] : memref<4x6x24xbf16, #tpu.memory_space<vmem>>, vector<1x6x24xbf16>
    %149 = vector.shape_cast %148 : vector<1x6x24xbf16> to vector<6x24xbf16>
    %cst_55 = arith.constant dense<0.000000e+00> : vector<6x128xf32>
    %150 = tpu.matmul %149, %144, %cst_55 {dimension_numbers = #tpu.dot_dimension_numbers<[1], [0], [0], [1], [0, 0, 1, 1], [], []>} : vector<6x24xbf16>, vector<24x128xbf16>, vector<6x128xf32> -> vector<6x128xf32>
    %151 = arith.maximumf %147, %150 : vector<6x128xf32>
    %c2_56 = arith.constant 2 : index
    %c0_57 = arith.constant 0 : index
    %c0_58 = arith.constant 0 : index
    %152 = vector.load %arg6[%c2_56, %c0_57, %c0_58] : memref<4x6x24xbf16, #tpu.memory_space<vmem>>, vector<1x6x24xbf16>
    %153 = vector.shape_cast %152 : vector<1x6x24xbf16> to vector<6x24xbf16>
    %cst_59 = arith.constant dense<0.000000e+00> : vector<6x128xf32>
    %154 = tpu.matmul %153, %144, %cst_59 {dimension_numbers = #tpu.dot_dimension_numbers<[1], [0], [0], [1], [0, 0, 1, 1], [], []>} : vector<6x24xbf16>, vector<24x128xbf16>, vector<6x128xf32> -> vector<6x128xf32>
    %155 = arith.maximumf %151, %154 : vector<6x128xf32>
    %c3_60 = arith.constant 3 : index
    %c0_61 = arith.constant 0 : index
    %c0_62 = arith.constant 0 : index
    %156 = vector.load %arg6[%c3_60, %c0_61, %c0_62] : memref<4x6x24xbf16, #tpu.memory_space<vmem>>, vector<1x6x24xbf16>
    %157 = vector.shape_cast %156 : vector<1x6x24xbf16> to vector<6x24xbf16>
    %cst_63 = arith.constant dense<0.000000e+00> : vector<6x128xf32>
    %158 = tpu.matmul %157, %144, %cst_63 {dimension_numbers = #tpu.dot_dimension_numbers<[1], [0], [0], [1], [0, 0, 1, 1], [], []>} : vector<6x24xbf16>, vector<24x128xbf16>, vector<6x128xf32> -> vector<6x128xf32>
    %159 = arith.maximumf %155, %158 : vector<6x128xf32>
    %c0_64 = arith.constant 0 : index
    %c0_65 = arith.constant 0 : index
    %c0_66 = arith.constant 0 : index
    %160 = vector.load %arg7[%c0_64, %c0_65, %c0_66] : memref<1x6x128xf32, #tpu.memory_space<vmem>>, vector<1x6x128xf32>
    %161 = vector.shape_cast %160 : vector<1x6x128xf32> to vector<6x128xf32>
    %162 = vector.shape_cast %159 : vector<6x128xf32> to vector<1x6x128xf32>
    tpu.vector_store %arg7[%c0_64, %c0_65, %c0_66], %162 {strides = array<i32>} : memref<1x6x128xf32, #tpu.memory_space<vmem>>, vector<1x6x128xf32>,
    return
  }
  func.func @transform_0(%arg0: i32) -> (i32, i32, i32) {
    %c0_i32 = arith.constant 0 : i32
    %c0_i32_0 = arith.constant 0 : i32
    %c0_i32_1 = arith.constant 0 : i32
    return %arg0, %c0_i32, %c0_i32_0 : i32, i32, i32
  }
  func.func @transform_1(%arg0: i32) -> (i32, i32) {
    %c0_i32 = arith.constant 0 : i32
    %c0_i32_0 = arith.constant 0 : i32
    %c0_i32_1 = arith.constant 0 : i32
    return %c0_i32, %c0_i32_0 : i32, i32
  }
  func.func @transform_2(%arg0: i32) -> (i32, i32, i32) {
    %c0_i32 = arith.constant 0 : i32
    %c0_i32_0 = arith.constant 0 : i32
    %c0_i32_1 = arith.constant 0 : i32
    %c0_i32_2 = arith.constant 0 : i32
    return %c0_i32, %c0_i32_0, %c0_i32_1 : i32, i32, i32
  }
  func.func @transform_3(%arg0: i32) -> (i32, i32) {
    %c0_i32 = arith.constant 0 : i32
    %c0_i32_0 = arith.constant 0 : i32
    %c0_i32_1 = arith.constant 0 : i32
    return %c0_i32, %c0_i32_0 : i32, i32
  }
  func.func @transform_4(%arg0: i32) -> (i32, i32) {
    %c0_i32 = arith.constant 0 : i32
    %c0_i32_0 = arith.constant 0 : i32
    %c0_i32_1 = arith.constant 0 : i32
    return %c0_i32, %c0_i32_0 : i32, i32
  }
  func.func @transform_5(%arg0: i32) -> (i32, i32, i32) {
    %c0_i32 = arith.constant 0 : i32
    %c0_i32_0 = arith.constant 0 : i32
    %c0_i32_1 = arith.constant 0 : i32
    %c0_i32_2 = arith.constant 0 : i32
    return %c0_i32, %c0_i32_0, %c0_i32_1 : i32, i32, i32
  }
  func.func @transform_6(%arg0: i32) -> (i32, i32, i32) {
    %c0_i32 = arith.constant 0 : i32
    %c0_i32_0 = arith.constant 0 : i32
    %c0_i32_1 = arith.constant 0 : i32
    return %arg0, %c0_i32, %c0_i32_0 : i32, i32, i32
  }
}

</mosaic_0001>

<llo_original>
// kernel: at_forward.1
$region0: #{at_forward.1}
  #allocation0 [shape = 'u32[]', space=smem, size = 0x4, offset = 0x4, fixed_abs, tag = 'smem constant byte address 0x4 - core index']
  #allocation1 [shape = 'u32[144,128]{1,0:T(1,128)}', space=vmem, size = 0x12000, scoped, tag = 'internal scratch']
  %s0 = inlined_call_operand.vmem [shape: bf16[1,24,32], index: 0, kind: input, shape index: {}]
  %s1 = inlined_call_operand.vmem [shape: bf16[32,128], index: 1, kind: input, shape index: {}]
  %s2 = inlined_call_operand.hbm [shape: bf16[6,128,128], index: 2, kind: input, shape index: {}]
  %s3 = inlined_call_operand.vmem [shape: f32[16,128], index: 3, kind: input, shape index: {}]
  %s4 = inlined_call_operand.vmem [shape: f32[24,24], index: 4, kind: input, shape index: {}]
  %s5 = inlined_call_operand.vmem [shape: bf16[4,6,24], index: 5, kind: input, shape index: {}]
  %s6 = inlined_call_operand.vmem [shape: f32[1,6,128], index: 6, kind: output, shape index: {}]
  %s7 = sld [smem:[#allocation0]]
  $region38: #{at_forward.1} parent=0
    _
  %s9 = ssub.s32 1, %s7
  %s10 = scalar_select 0, %s9, %s7
  $region1: #{at_forward.1} parent=0
    #allocation2 [shape = 'u8[196608]{0}', space=vmem, size = 0x30000, scoped, tag = 'input window, operand 2, single buffered']
    #allocation3 [shape = 's32[1]{0}', space=sflag, size = 0x4, scoped, tag = 'scoped memory for at_forward.1']
    %11 = vsyncpa [#allocation3], 0
    // Predicated region
    $region2: #{at_forward.1} parent=1 // pred_check
      _
    $region3: #{at_forward.1} parent=1 // pred_check_branch
      %13 = sbr.rel (0) target = $region5
    $region4: #{at_forward.1} parent=1 // pred_region
      _
    $region5: #{at_forward.1} parent=1 // pred_fallthru
      _
    // Predicated region
    $region6: #{at_forward.1} parent=1 // pred_check
      _
    $region7: #{at_forward.1} parent=1 // pred_check_branch
      %15 = sbr.rel (0) target = $region9
    $region8: #{at_forward.1} parent=1 // pred_region
      _
    $region9: #{at_forward.1} parent=1 // pred_fallthru
      _
    // Predicated region
    $region10: #{at_forward.1} parent=1 // pred_check
      _
    $region11: #{at_forward.1} parent=1 // pred_check_branch
      %17 = sbr.rel (0) target = $region13
    $region12: #{at_forward.1} parent=1 // pred_region
      %s19 = ssub.s32 6144, 6144
      %20 = vsyncadd [#allocation3], %s19
      %s21 = sshll.u32 [#allocation2], 4
      %s22 = int_to_ptr.vmem [resolvable:$true] %s21
      %27 = dma.hbm_to_vmem [thread:$0]  %s2, 6144, %s22, [#allocation3], 64, 64, 4
    $region13: #{at_forward.1} parent=1 // pred_fallthru
      _
    // Predicated region
    $region14: #{at_forward.1} parent=1 // pred_check
      _
    $region15: #{at_forward.1} parent=1 // pred_check_branch
      %29 = sbr.rel (0) target = $region17
    $region16: #{at_forward.1} parent=1 // pred_region
      _
    $region17: #{at_forward.1} parent=1 // pred_fallthru
      _
    // Predicated region
    $region18: #{at_forward.1} parent=1 // pred_check
      _
    $region19: #{at_forward.1} parent=1 // pred_check_branch
      %31 = sbr.rel (0) target = $region21
    $region20: #{at_forward.1} parent=1 // pred_region
      _
    $region21: #{at_forward.1} parent=1 // pred_fallthru
      _
    // Predicated region
    $region22: #{at_forward.1} parent=1 // pred_check
      _
    $region23: #{at_forward.1} parent=1 // pred_check_branch
      %33 = sbr.rel (0) target = $region25
    $region24: #{at_forward.1} parent=1 // pred_region
      _
    $region25: #{at_forward.1} parent=1 // pred_fallthru
      _
    // Predicated region
    $region26: #{at_forward.1} parent=1 // pred_check
      _
    $region27: #{at_forward.1} parent=1 // pred_check_branch
      %35 = sbr.rel (0) target = $region29
    $region28: #{at_forward.1} parent=1 // pred_region
      %36 = dma.done [#allocation3], 6144
    $region29: #{at_forward.1} parent=1 // pred_fallthru
      _
    %v38 = vld [vmem:[%s0] sm:$0xf]
    %v39 = vld [vmem:[%s0 + $0x4] sm:$0xf]
    %v40 = vld [vmem:[%s0 + $0x8] sm:$0xf]
    %v41 = vld [vmem:[%s3] sm:$0xff]
    %v42 = vld [vmem:[%s3 + $0x8] sm:$0xff]
    %v43 = vld [vmem:[%s1] sm:$0xf]
    %v44 = vld [vmem:[%s1 + $0x4] sm:$0xf]
    %v45 = vld [vmem:[%s1 + $0x8] sm:$0xf]
    %v46 = vld [vmem:[%s1 + $0xc] sm:$0xf]
    %v47 = vlaneseq
    %v48 = vshrl.u32 %v47, 7
    %v49 = vsub.s32 0, %v48
    %v50 = vrot.slane %v41, %v49
    %v54 = vunpack.c.l.b16 %v38
    %v55 = vunpack.c.l.b16 %v39
    %v56 = vunpack.c.l.b16 %v40
    %v57 = vpack.c.b16 %v55, %v54
    %v58 = vpack.c.b16 %v56, %v56
    %v63 = vunpack.c.l.b16 %v43
    %v64 = vunpack.c.l.b16 %v44
    %v65 = vunpack.c.l.b16 %v45
    %v66 = vunpack.c.l.b16 %v46
    %v67 = vpack.c.b16 %v64, %v63
    %v68 = vpack.c.b16 %v66, %v65
    %vm71 = vcmask 261120
    %v73 = vsel %vm71, %v57, 0
    %v76 = vsel %vm71, %v58, 0
    %78 = vmatprep.subr.bf16.mxu0 0
    %79 = vmatpush1.bf16.msra.mxu0 %v67
    %80 = vmatprep.subr.bf16.mxu0 0
    %81 = vmatpush1.bf16.msra.mxu0 %v68
    %82 = vmatprep.subr.bf16.mxu0 0
    %83 = vmatpush1.bf16.msra.mxu0 0
    %84 = vmatprep.subr.bf16.mxu0 0
    %85 = vmatpush1.bf16.msra.mxu0 0
    %86 = vmatprep.subr.bf16.mxu0 0
    %87 = vmatpush1.bf16.msra.mxu0 0
    %88 = vmatprep.subr.bf16.mxu0 0
    %89 = vmatpush1.bf16.msra.mxu0 0
    %90 = vmatprep.subr.bf16.mxu0 0
    %91 = vmatpush1.bf16.msra.mxu0 0
    %92 = vmatprep.subr.bf16.mxu0 0
    %93 = vmatpush1.bf16.msra.mxu0 0
    %94 = vmatprep.subr.bf16.mxu0 0
    %95 = vmatpush1.bf16.msra.mxu0 0
    %96 = vmatprep.subr.bf16.mxu0 0
    %97 = vmatpush1.bf16.msra.mxu0 0
    %98 = vmatprep.subr.bf16.mxu0 0
    %99 = vmatpush1.bf16.msra.mxu0 0
    %100 = vmatprep.subr.bf16.mxu0 0
    %101 = vmatpush1.bf16.msra.mxu0 0
    %102 = vmatprep.subr.bf16.mxu0 0
    %103 = vmatpush1.bf16.msra.mxu0 0
    %104 = vmatprep.subr.bf16.mxu0 0
    %105 = vmatpush1.bf16.msra.mxu0 0
    %106 = vmatprep.subr.bf16.mxu0 0
    %107 = vmatpush1.bf16.msra.mxu0 0
    %108 = vmatprep.subr.bf16.mxu0 0
    %109 = vmatpush1.bf16.msra.mxu0 0
    %110 = vmatprep.mubr.bf16.mxu0 0
    %111 = vmatmul.mubr.bf16.gmra.mrb[0].mxu0 %v73
    %v112 = vpop.f32.mrb[0].mxu0
    %v113 = vadd.f32 %v50, %v112
    %v114 = vpop.f32.mrb[0].mxu0
    %v115 = vpop.f32.mrb[0].mxu0
    %v116 = vadd.f32 %v50, %v115
    %v117 = vpop.f32.mrb[0].mxu0
    %118 = vmatprep.mubr.bf16.mxu0 0
    %119 = vmatmul.mubr.bf16.gmra.mrb[0].mxu0 %v76
    %v120 = vpop.f32.mrb[0].mxu0
    %v121 = vadd.f32 %v50, %v120
    %v122 = vpop.f32.mrb[0].mxu0
    %v123 = vpop.f32.mrb[0].mxu0
    %v124 = vpop.f32.mrb[0].mxu0
    %125 = vdwg.mxu0
    %126 = vadd.xlane.f32.xlu0 %v113
    %v127 = vpop.xlane.xlu0 %126
    %128 = vadd.xlane.f32.xlu0 %v116
    %v129 = vpop.xlane.xlu0 %128
    %130 = vadd.xlane.f32.xlu0 %v121
    %v131 = vpop.xlane.xlu0 %130
    %v132 = vrcp.pop 128.0
    %v133 = vmul.f32 %v127, %v132
    %v134 = vmul.f32 %v129, %v132
    %v135 = vmul.f32 %v131, %v132
    %v136 = vsub.f32 %v113, %v133
    %v137 = vsub.f32 %v116, %v134
    %v138 = vsub.f32 %v121, %v135
    %v139 = vmul.f32 %v136, %v136
    %v140 = vmul.f32 %v137, %v137
    %v141 = vmul.f32 %v138, %v138
    %142 = vadd.xlane.f32.xlu0 %v139
    %v143 = vpop.xlane.xlu0 %142
    %144 = vadd.xlane.f32.xlu0 %v140
    %v145 = vpop.xlane.xlu0 %144
    %146 = vadd.xlane.f32.xlu0 %v141
    %v147 = vpop.xlane.xlu0 %146
    %v148 = vmul.f32 %v143, %v132
    %v149 = vmul.f32 %v145, %v132
    %v150 = vmul.f32 %v147, %v132
    %v151 = vadd.f32 %v148, 1e-05
    %v152 = vadd.f32 %v149, 1e-05
    %v153 = vadd.f32 %v150, 1e-05
    %v154 = vrsqrt.pop %v151
    %v155 = vrsqrt.pop %v152
    %v156 = vrsqrt.pop %v153
    %v157 = vmul.f32 %v136, %v154
    %v158 = vmul.f32 %v137, %v155
    %v159 = vmul.f32 %v138, %v156
    %v160 = vlaneseq
    %v161 = vshrl.u32 %v160, 7
    %v162 = vsub.s32 1, %v161
    %v163 = vrot.slane %v41, %v162
    %v164 = vmul.f32 %v157, %v163
    %v165 = vmul.f32 %v158, %v163
    %v166 = vmul.f32 %v159, %v163
    %v167 = vlaneseq
    %v168 = vshrl.u32 %v167, 7
    %v169 = vsub.s32 2, %v168
    %v170 = vrot.slane %v41, %v169
    %v171 = vadd.f32 %v164, %v170
    %v172 = vadd.f32 %v165, %v170
    %v173 = vadd.f32 %v166, %v170
    %v174 = vmax.f32 %v171, 0.0
    %v175 = vmax.f32 %v172, 0.0
    %v176 = vmax.f32 %v173, 0.0
    %v177 = vpack.c.bf16 %v175, %v174
    %v178 = vpack.c.bf16 %v176, %v176
    %v179 = vld [vmem:[#allocation2] sm:$0xf]
    %v180 = vld [vmem:[#allocation2 + $0x4] sm:$0xf]
    %v181 = vld [vmem:[#allocation2 + $0x8] sm:$0xf]
    %v182 = vld [vmem:[#allocation2 + $0xc] sm:$0xf]
    %v183 = vld [vmem:[#allocation2 + $0x10] sm:$0xf]
    %v184 = vld [vmem:[#allocation2 + $0x14] sm:$0xf]
    %v185 = vld [vmem:[#allocation2 + $0x18] sm:$0xf]
    %v186 = vld [vmem:[#allocation2 + $0x1c] sm:$0xf]
    %v187 = vld [vmem:[#allocation2 + $0x20] sm:$0xf]
    %v188 = vld [vmem:[#allocation2 + $0x24] sm:$0xf]
    %v189 = vld [vmem:[#allocation2 + $0x28] sm:$0xf]
    %v190 = vld [vmem:[#allocation2 + $0x2c] sm:$0xf]
    %v191 = vld [vmem:[#allocation2 + $0x30] sm:$0xf]
    %v192 = vld [vmem:[#allocation2 + $0x34] sm:$0xf]
    %v193 = vld [vmem:[#allocation2 + $0x38] sm:$0xf]
    %v194 = vld [vmem:[#allocation2 + $0x3c] sm:$0xf]
    %v195 = vlaneseq
    %v196 = vshrl.u32 %v195, 7
    %v197 = vsub.s32 3, %v196
    %v198 = vrot.slane %v41, %v197
    %v215 = vunpack.c.l.b16 %v179
    %v216 = vunpack.c.l.b16 %v180
    %v217 = vunpack.c.l.b16 %v181
    %v218 = vunpack.c.l.b16 %v182
    %v219 = vunpack.c.l.b16 %v183
    %v220 = vunpack.c.l.b16 %v184
    %v221 = vunpack.c.l.b16 %v185
    %v222 = vunpack.c.l.b16 %v186
    %v223 = vunpack.c.l.b16 %v187
    %v224 = vunpack.c.l.b16 %v188
    %v225 = vunpack.c.l.b16 %v189
    %v226 = vunpack.c.l.b16 %v190
    %v227 = vunpack.c.l.b16 %v191
    %v228 = vunpack.c.l.b16 %v192
    %v229 = vunpack.c.l.b16 %v193
    %v230 = vunpack.c.l.b16 %v194
    %v231 = vpack.c.b16 %v216, %v215
    %v232 = vpack.c.b16 %v218, %v217
    %v233 = vpack.c.b16 %v220, %v219
    %v234 = vpack.c.b16 %v222, %v221
    %v235 = vpack.c.b16 %v224, %v223
    %v236 = vpack.c.b16 %v226, %v225
    %v237 = vpack.c.b16 %v228, %v227
    %v238 = vpack.c.b16 %v230, %v229
    %247 = vmatprep.subr.bf16.mxu0 0
    %248 = vmatpush1.bf16.msra.mxu0 %v231
    %249 = vmatprep.subr.bf16.mxu0 0
    %250 = vmatpush1.bf16.msra.mxu0 %v232
    %251 = vmatprep.subr.bf16.mxu0 0
    %252 = vmatpush1.bf16.msra.mxu0 %v233
    %253 = vmatprep.subr.bf16.mxu0 0
    %254 = vmatpush1.bf16.msra.mxu0 %v234
    %255 = vmatprep.subr.bf16.mxu0 0
    %256 = vmatpush1.bf16.msra.mxu0 %v235
    %257 = vmatprep.subr.bf16.mxu0 0
    %258 = vmatpush1.bf16.msra.mxu0 %v236
    %259 = vmatprep.subr.bf16.mxu0 0
    %260 = vmatpush1.bf16.msra.mxu0 %v237
    %261 = vmatprep.subr.bf16.mxu0 0
    %262 = vmatpush1.bf16.msra.mxu0 %v238
    %263 = vmatprep.subr.bf16.mxu0 0
    %264 = vmatpush1.bf16.msra.mxu0 0
    %265 = vmatprep.subr.bf16.mxu0 0
    %266 = vmatpush1.bf16.msra.mxu0 0
    %267 = vmatprep.subr.bf16.mxu0 0
    %268 = vmatpush1.bf16.msra.mxu0 0
    %269 = vmatprep.subr.bf16.mxu0 0
    %270 = vmatpush1.bf16.msra.mxu0 0
    %271 = vmatprep.subr.bf16.mxu0 0
    %272 = vmatpush1.bf16.msra.mxu0 0
    %273 = vmatprep.subr.bf16.mxu0 0
    %274 = vmatpush1.bf16.msra.mxu0 0
    %275 = vmatprep.subr.bf16.mxu0 0
    %276 = vmatpush1.bf16.msra.mxu0 0
    %277 = vmatprep.subr.bf16.mxu0 0
    %278 = vmatpush1.bf16.msra.mxu0 0
    %279 = vmatprep.mubr.bf16.mxu0 0
    %280 = vmatmul.mubr.bf16.gmra.mrb[0].mxu0 %v177
    %v281 = vpop.f32.mrb[0].mxu0
    %v282 = vadd.f32 %v198, %v281
    %v283 = vpop.f32.mrb[0].mxu0
    %v284 = vpop.f32.mrb[0].mxu0
    %v285 = vadd.f32 %v198, %v284
    %v286 = vpop.f32.mrb[0].mxu0
    %287 = vmatprep.mubr.bf16.mxu0 0
    %288 = vmatmul.mubr.bf16.gmra.mrb[0].mxu0 %v178
    %v289 = vpop.f32.mrb[0].mxu0
    %v290 = vadd.f32 %v198, %v289
    %v291 = vpop.f32.mrb[0].mxu0
    %v292 = vpop.f32.mrb[0].mxu0
    %v293 = vpop.f32.mrb[0].mxu0
    %294 = vdwg.mxu0
    %s295 = scalar_lea.vmem [#allocation2], 64
    %v296 = vld [vmem:[%s295] sm:$0xf]
    %v297 = vld [vmem:[%s295 + $0x4] sm:$0xf]
    %v298 = vld [vmem:[%s295 + $0x8] sm:$0xf]
    %v299 = vld [vmem:[%s295 + $0xc] sm:$0xf]
    %v300 = vld [vmem:[%s295 + $0x10] sm:$0xf]
    %v301 = vld [vmem:[%s295 + $0x14] sm:$0xf]
    %v302 = vld [vmem:[%s295 + $0x18] sm:$0xf]
    %v303 = vld [vmem:[%s295 + $0x1c] sm:$0xf]
    %v304 = vld [vmem:[%s295 + $0x20] sm:$0xf]
    %v305 = vld [vmem:[%s295 + $0x24] sm:$0xf]
    %v306 = vld [vmem:[%s295 + $0x28] sm:$0xf]
    %v307 = vld [vmem:[%s295 + $0x2c] sm:$0xf]
    %v308 = vld [vmem:[%s295 + $0x30] sm:$0xf]
    %v309 = vld [vmem:[%s295 + $0x34] sm:$0xf]
    %v310 = vld [vmem:[%s295 + $0x38] sm:$0xf]
    %v311 = vld [vmem:[%s295 + $0x3c] sm:$0xf]
    %v312 = vlaneseq
    %v313 = vshrl.u32 %v312, 7
    %v314 = vsub.s32 4, %v313
    %v315 = vrot.slane %v41, %v314
    %v332 = vunpack.c.l.b16 %v296
    %v333 = vunpack.c.l.b16 %v297
    %v334 = vunpack.c.l.b16 %v298
    %v335 = vunpack.c.l.b16 %v299
    %v336 = vunpack.c.l.b16 %v300
    %v337 = vunpack.c.l.b16 %v301
    %v338 = vunpack.c.l.b16 %v302
    %v339 = vunpack.c.l.b16 %v303
    %v340 = vunpack.c.l.b16 %v304
    %v341 = vunpack.c.l.b16 %v305
    %v342 = vunpack.c.l.b16 %v306
    %v343 = vunpack.c.l.b16 %v307
    %v344 = vunpack.c.l.b16 %v308
    %v345 = vunpack.c.l.b16 %v309
    %v346 = vunpack.c.l.b16 %v310
    %v347 = vunpack.c.l.b16 %v311
    %v348 = vpack.c.b16 %v333, %v332
    %v349 = vpack.c.b16 %v335, %v334
    %v350 = vpack.c.b16 %v337, %v336
    %v351 = vpack.c.b16 %v339, %v338
    %v352 = vpack.c.b16 %v341, %v340
    %v353 = vpack.c.b16 %v343, %v342
    %v354 = vpack.c.b16 %v345, %v344
    %v355 = vpack.c.b16 %v347, %v346
    %364 = vmatprep.subr.bf16.mxu0 0
    %365 = vmatpush1.bf16.msra.mxu0 %v348
    %366 = vmatprep.subr.bf16.mxu0 0
    %367 = vmatpush1.bf16.msra.mxu0 %v349
    %368 = vmatprep.subr.bf16.mxu0 0
    %369 = vmatpush1.bf16.msra.mxu0 %v350
    %370 = vmatprep.subr.bf16.mxu0 0
    %371 = vmatpush1.bf16.msra.mxu0 %v351
    %372 = vmatprep.subr.bf16.mxu0 0
    %373 = vmatpush1.bf16.msra.mxu0 %v352
    %374 = vmatprep.subr.bf16.mxu0 0
    %375 = vmatpush1.bf16.msra.mxu0 %v353
    %376 = vmatprep.subr.bf16.mxu0 0
    %377 = vmatpush1.bf16.msra.mxu0 %v354
    %378 = vmatprep.subr.bf16.mxu0 0
    %379 = vmatpush1.bf16.msra.mxu0 %v355
    %380 = vmatprep.subr.bf16.mxu0 0
    %381 = vmatpush1.bf16.msra.mxu0 0
    %382 = vmatprep.subr.bf16.mxu0 0
    %383 = vmatpush1.bf16.msra.mxu0 0
    %384 = vmatprep.subr.bf16.mxu0 0
    %385 = vmatpush1.bf16.msra.mxu0 0
    %386 = vmatprep.subr.bf16.mxu0 0
    %387 = vmatpush1.bf16.msra.mxu0 0
    %388 = vmatprep.subr.bf16.mxu0 0
    %389 = vmatpush1.bf16.msra.mxu0 0
    %390 = vmatprep.subr.bf16.mxu0 0
    %391 = vmatpush1.bf16.msra.mxu0 0
    %392 = vmatprep.subr.bf16.mxu0 0
    %393 = vmatpush1.bf16.msra.mxu0 0
    %394 = vmatprep.subr.bf16.mxu0 0
    %395 = vmatpush1.bf16.msra.mxu0 0
    %396 = vmatprep.mubr.bf16.mxu0 0
    %397 = vmatmul.mubr.bf16.gmra.mrb[0].mxu0 %v177
    %v398 = vpop.f32.mrb[0].mxu0
    %v399 = vadd.f32 %v315, %v398
    %v400 = vpop.f32.mrb[0].mxu0
    %v401 = vpop.f32.mrb[0].mxu0
    %v402 = vadd.f32 %v315, %v401
    %v403 = vpop.f32.mrb[0].mxu0
    %404 = vmatprep.mubr.bf16.mxu0 0
    %405 = vmatmul.mubr.bf16.gmra.mrb[0].mxu0 %v178
    %v406 = vpop.f32.mrb[0].mxu0
    %v407 = vadd.f32 %v315, %v406
    %v408 = vpop.f32.mrb[0].mxu0
    %v409 = vpop.f32.mrb[0].mxu0
    %v410 = vpop.f32.mrb[0].mxu0
    %411 = vdwg.mxu0
    %s412 = scalar_lea.vmem [#allocation2], 128
    %v413 = vld [vmem:[%s412] sm:$0xf]
    %v414 = vld [vmem:[%s412 + $0x4] sm:$0xf]
    %v415 = vld [vmem:[%s412 + $0x8] sm:$0xf]
    %v416 = vld [vmem:[%s412 + $0xc] sm:$0xf]
    %v417 = vld [vmem:[%s412 + $0x10] sm:$0xf]
    %v418 = vld [vmem:[%s412 + $0x14] sm:$0xf]
    %v419 = vld [vmem:[%s412 + $0x18] sm:$0xf]
    %v420 = vld [vmem:[%s412 + $0x1c] sm:$0xf]
    %v421 = vld [vmem:[%s412 + $0x20] sm:$0xf]
    %v422 = vld [vmem:[%s412 + $0x24] sm:$0xf]
    %v423 = vld [vmem:[%s412 + $0x28] sm:$0xf]
    %v424 = vld [vmem:[%s412 + $0x2c] sm:$0xf]
    %v425 = vld [vmem:[%s412 + $0x30] sm:$0xf]
    %v426 = vld [vmem:[%s412 + $0x34] sm:$0xf]
    %v427 = vld [vmem:[%s412 + $0x38] sm:$0xf]
    %v428 = vld [vmem:[%s412 + $0x3c] sm:$0xf]
    %v429 = vlaneseq
    %v430 = vshrl.u32 %v429, 7
    %v431 = vsub.s32 5, %v430
    %v432 = vrot.slane %v41, %v431
    %v449 = vunpack.c.l.b16 %v413
    %v450 = vunpack.c.l.b16 %v414
    %v451 = vunpack.c.l.b16 %v415
    %v452 = vunpack.c.l.b16 %v416
    %v453 = vunpack.c.l.b16 %v417
    %v454 = vunpack.c.l.b16 %v418
    %v455 = vunpack.c.l.b16 %v419
    %v456 = vunpack.c.l.b16 %v420
    %v457 = vunpack.c.l.b16 %v421
    %v458 = vunpack.c.l.b16 %v422
    %v459 = vunpack.c.l.b16 %v423
    %v460 = vunpack.c.l.b16 %v424
    %v461 = vunpack.c.l.b16 %v425
    %v462 = vunpack.c.l.b16 %v426
    %v463 = vunpack.c.l.b16 %v427
    %v464 = vunpack.c.l.b16 %v428
    %v465 = vpack.c.b16 %v450, %v449
    %v466 = vpack.c.b16 %v452, %v451
    %v467 = vpack.c.b16 %v454, %v453
    %v468 = vpack.c.b16 %v456, %v455
    %v469 = vpack.c.b16 %v458, %v457
    %v470 = vpack.c.b16 %v460, %v459
    %v471 = vpack.c.b16 %v462, %v461
    %v472 = vpack.c.b16 %v464, %v463
    %481 = vmatprep.subr.bf16.mxu0 0
    %482 = vmatpush1.bf16.msra.mxu0 %v465
    %483 = vmatprep.subr.bf16.mxu0 0
    %484 = vmatpush1.bf16.msra.mxu0 %v466
    %485 = vmatprep.subr.bf16.mxu0 0
    %486 = vmatpush1.bf16.msra.mxu0 %v467
    %487 = vmatprep.subr.bf16.mxu0 0
    %488 = vmatpush1.bf16.msra.mxu0 %v468
    %489 = vmatprep.subr.bf16.mxu0 0
    %490 = vmatpush1.bf16.msra.mxu0 %v469
    %491 = vmatprep.subr.bf16.mxu0 0
    %492 = vmatpush1.bf16.msra.mxu0 %v470
    %493 = vmatprep.subr.bf16.mxu0 0
    %494 = vmatpush1.bf16.msra.mxu0 %v471
    %495 = vmatprep.subr.bf16.mxu0 0
    %496 = vmatpush1.bf16.msra.mxu0 %v472
    %497 = vmatprep.subr.bf16.mxu0 0
    %498 = vmatpush1.bf16.msra.mxu0 0
    %499 = vmatprep.subr.bf16.mxu0 0
    %500 = vmatpush1.bf16.msra.mxu0 0
    %501 = vmatprep.subr.bf16.mxu0 0
    %502 = vmatpush1.bf16.msra.mxu0 0
    %503 = vmatprep.subr.bf16.mxu0 0
    %504 = vmatpush1.bf16.msra.mxu0 0
    %505 = vmatprep.subr.bf16.mxu0 0
    %506 = vmatpush1.bf16.msra.mxu0 0
    %507 = vmatprep.subr.bf16.mxu0 0
    %508 = vmatpush1.bf16.msra.mxu0 0
    %509 = vmatprep.subr.bf16.mxu0 0
    %510 = vmatpush1.bf16.msra.mxu0 0
    %511 = vmatprep.subr.bf16.mxu0 0
    %512 = vmatpush1.bf16.msra.mxu0 0
    %513 = vmatprep.mubr.bf16.mxu0 0
    %514 = vmatmul.mubr.bf16.gmra.mrb[0].mxu0 %v177
    %v515 = vpop.f32.mrb[0].mxu0
    %v516 = vadd.f32 %v432, %v515
    %v517 = vpop.f32.mrb[0].mxu0
    %v518 = vpop.f32.mrb[0].mxu0
    %v519 = vadd.f32 %v432, %v518
    %v520 = vpop.f32.mrb[0].mxu0
    %521 = vmatprep.mubr.bf16.mxu0 0
    %522 = vmatmul.mubr.bf16.gmra.mrb[0].mxu0 %v178
    %v523 = vpop.f32.mrb[0].mxu0
    %v524 = vadd.f32 %v432, %v523
    %v525 = vpop.f32.mrb[0].mxu0
    %v526 = vpop.f32.mrb[0].mxu0
    %v527 = vpop.f32.mrb[0].mxu0
    %528 = vdwg.mxu0
    %v529 = vpack.c.bf16 %v285, %v282
    %v530 = vpack.c.bf16 %v290, %v290
    %v531 = vpack.c.bf16 %v402, %v399
    %v532 = vpack.c.bf16 %v407, %v407
    %v533 = vld [vmem:[%s4] sm:$0xff]
    %v534 = vld [vmem:[%s4 + $0x8] sm:$0xff]
    %v535 = vld [vmem:[%s4 + $0x10] sm:$0xff]
    %536 = vmatprep.subr.bf16.mxu0 0
    %537 = vmatpush1.bf16.xpose.msra.mxu0 %v531
    %538 = vmatprep.subr.bf16.mxu0 0
    %539 = vmatpush1.bf16.xpose.msra.mxu0 %v532
    %540 = vmatprep.subr.bf16.mxu0 0
    %541 = vmatpush1.bf16.xpose.msra.mxu0 0
    %542 = vmatprep.subr.bf16.mxu0 0
    %543 = vmatpush1.bf16.xpose.msra.mxu0 0
    %544 = vmatprep.subr.bf16.mxu0 0
    %545 = vmatpush1.bf16.xpose.msra.mxu0 0
    %546 = vmatprep.subr.bf16.mxu0 0
    %547 = vmatpush1.bf16.xpose.msra.mxu0 0
    %548 = vmatprep.subr.bf16.mxu0 0
    %549 = vmatpush1.bf16.xpose.msra.mxu0 0
    %550 = vmatprep.subr.bf16.mxu0 0
    %551 = vmatpush1.bf16.xpose.msra.mxu0 0
    %552 = vmatprep.subr.bf16.mxu0 0
    %553 = vmatpush1.bf16.xpose.msra.mxu0 0
    %554 = vmatprep.subr.bf16.mxu0 0
    %555 = vmatpush1.bf16.xpose.msra.mxu0 0
    %556 = vmatprep.subr.bf16.mxu0 0
    %557 = vmatpush1.bf16.xpose.msra.mxu0 0
    %558 = vmatprep.subr.bf16.mxu0 0
    %559 = vmatpush1.bf16.xpose.msra.mxu0 0
    %560 = vmatprep.subr.bf16.mxu0 0
    %561 = vmatpush1.bf16.xpose.msra.mxu0 0
    %562 = vmatprep.subr.bf16.mxu0 0
    %563 = vmatpush1.bf16.xpose.msra.mxu0 0
    %564 = vmatprep.subr.bf16.mxu0 0
    %565 = vmatpush1.bf16.xpose.msra.mxu0 0
    %566 = vmatprep.subr.bf16.mxu0 0
    %567 = vmatpush1.bf16.xpose.msra.mxu0 0
    %568 = vmatprep.mubr.bf16.mxu0 0
    %569 = vmatmul.mubr.bf16.gmra.mrb[0].mxu0 %v529
    %v570 = vpop.f32.mrb[0].mxu0
    %v571 = vadd.f32 %v533, %v570
    %v572 = vpop.f32.mrb[0].mxu0
    %v573 = vpop.f32.mrb[0].mxu0
    %v574 = vadd.f32 %v534, %v573
    %v575 = vpop.f32.mrb[0].mxu0
    %576 = vmatprep.mubr.bf16.mxu0 0
    %577 = vmatmul.mubr.bf16.gmra.mrb[0].mxu0 %v530
    %v578 = vpop.f32.mrb[0].mxu0
    %v579 = vadd.f32 %v535, %v578
    %v580 = vpop.f32.mrb[0].mxu0
    %v581 = vpop.f32.mrb[0].mxu0
    %v582 = vpop.f32.mrb[0].mxu0
    %583 = vdwg.mxu0
    %vm584 = vcmask 195584
    %v585 = vsel %vm584, %v571, -inf
    %586 = vmax.xlane.f32.xlu0 %v585
    %v587 = vpop.xlane.xlu0 %586
    %v588 = vsel %vm584, %v574, -inf
    %589 = vmax.xlane.f32.xlu0 %v588
    %v590 = vpop.xlane.xlu0 %589
    %v591 = vsel %vm584, %v579, -inf
    %592 = vmax.xlane.f32.xlu0 %v591
    %v593 = vpop.xlane.xlu0 %592
    %v594 = vsub.f32 %v571, %v587
    %v595 = vsub.f32 %v574, %v590
    %v596 = vsub.f32 %v579, %v593
    %v597 = vmul.f32 %v594, 1.442695
    %v598 = vpow.pop %v597
    %v599 = vmul.f32 %v595, 1.442695
    %v600 = vpow.pop %v599
    %v601 = vmul.f32 %v596, 1.442695
    %v602 = vpow.pop %v601
    %v603 = vsel %vm584, %v598, 0.0
    %604 = vadd.xlane.f32.xlu0 %v603
    %v605 = vpop.xlane.xlu0 %604
    %v606 = vsel %vm584, %v600, 0.0
    %607 = vadd.xlane.f32.xlu0 %v606
    %v608 = vpop.xlane.xlu0 %607
    %v609 = vsel %vm584, %v602, 0.0
    %610 = vadd.xlane.f32.xlu0 %v609
    %v611 = vpop.xlane.xlu0 %610
    %v612 = vrcp.pop %v605
    %v613 = vrcp.pop %v608
    %v614 = vrcp.pop %v611
    %v615 = vmul.f32 %v598, %v612
    %v616 = vmul.f32 %v600, %v613
    %v617 = vmul.f32 %v602, %v614
    %v618 = vpack.c.bf16 %v616, %v615
    %v619 = vpack.c.bf16 %v617, %v617
    %v620 = vpack.c.bf16 %v519, %v516
    %v621 = vpack.c.bf16 %v524, %v524
    %v623 = vsel %vm584, %v618, 0
    %v626 = vsel %vm584, %v619, 0
    %vm628 = vcmask 1043456
    %v630 = vsel %vm628, %v621, 0
    %632 = vmatprep.subr.bf16.mxu0 0
    %633 = vmatpush1.bf16.msra.mxu0 %v620
    %634 = vmatprep.subr.bf16.mxu0 0
    %635 = vmatpush1.bf16.msra.mxu0 %v630
    %636 = vmatprep.subr.bf16.mxu0 0
    %637 = vmatpush1.bf16.msra.mxu0 0
    %638 = vmatprep.subr.bf16.mxu0 0
    %639 = vmatpush1.bf16.msra.mxu0 0
    %640 = vmatprep.subr.bf16.mxu0 0
    %641 = vmatpush1.bf16.msra.mxu0 0
    %642 = vmatprep.subr.bf16.mxu0 0
    %643 = vmatpush1.bf16.msra.mxu0 0
    %644 = vmatprep.subr.bf16.mxu0 0
    %645 = vmatpush1.bf16.msra.mxu0 0
    %646 = vmatprep.subr.bf16.mxu0 0
    %647 = vmatpush1.bf16.msra.mxu0 0
    %648 = vmatprep.subr.bf16.mxu0 0
    %649 = vmatpush1.bf16.msra.mxu0 0
    %650 = vmatprep.subr.bf16.mxu0 0
    %651 = vmatpush1.bf16.msra.mxu0 0
    %652 = vmatprep.subr.bf16.mxu0 0
    %653 = vmatpush1.bf16.msra.mxu0 0
    %654 = vmatprep.subr.bf16.mxu0 0
    %655 = vmatpush1.bf16.msra.mxu0 0
    %656 = vmatprep.subr.bf16.mxu0 0
    %657 = vmatpush1.bf16.msra.mxu0 0
    %658 = vmatprep.subr.bf16.mxu0 0
    %659 = vmatpush1.bf16.msra.mxu0 0
    %660 = vmatprep.subr.bf16.mxu0 0
    %661 = vmatpush1.bf16.msra.mxu0 0
    %662 = vmatprep.subr.bf16.mxu0 0
    %663 = vmatpush1.bf16.msra.mxu0 0
    %664 = vmatprep.mubr.bf16.mxu0 0
    %665 = vmatmul.mubr.bf16.gmra.mrb[0].mxu0 %v623
    %v666 = vpop.f32.mrb[0].mxu0
    %v667 = vadd.f32 0.0, %v666
    %v668 = vpop.f32.mrb[0].mxu0
    %v669 = vpop.f32.mrb[0].mxu0
    %v670 = vadd.f32 0.0, %v669
    %v671 = vpop.f32.mrb[0].mxu0
    %672 = vmatprep.mubr.bf16.mxu0 0
    %673 = vmatmul.mubr.bf16.gmra.mrb[0].mxu0 %v626
    %v674 = vpop.f32.mrb[0].mxu0
    %v675 = vadd.f32 0.0, %v674
    %v676 = vpop.f32.mrb[0].mxu0
    %v677 = vpop.f32.mrb[0].mxu0
    %v678 = vpop.f32.mrb[0].mxu0
    %679 = vdwg.mxu0
    %s680 = scalar_lea.vmem [#allocation2], 192
    %v681 = vld [vmem:[%s680] sm:$0xf]
    %v682 = vld [vmem:[%s680 + $0x4] sm:$0xf]
    %v683 = vld [vmem:[%s680 + $0x8] sm:$0xf]
    %v684 = vld [vmem:[%s680 + $0xc] sm:$0xf]
    %v685 = vld [vmem:[%s680 + $0x10] sm:$0xf]
    %v686 = vld [vmem:[%s680 + $0x14] sm:$0xf]
    %v687 = vld [vmem:[%s680 + $0x18] sm:$0xf]
    %v688 = vld [vmem:[%s680 + $0x1c] sm:$0xf]
    %v689 = vld [vmem:[%s680 + $0x20] sm:$0xf]
    %v690 = vld [vmem:[%s680 + $0x24] sm:$0xf]
    %v691 = vld [vmem:[%s680 + $0x28] sm:$0xf]
    %v692 = vld [vmem:[%s680 + $0x2c] sm:$0xf]
    %v693 = vld [vmem:[%s680 + $0x30] sm:$0xf]
    %v694 = vld [vmem:[%s680 + $0x34] sm:$0xf]
    %v695 = vld [vmem:[%s680 + $0x38] sm:$0xf]
    %v696 = vld [vmem:[%s680 + $0x3c] sm:$0xf]
    %v697 = vpack.c.bf16 %v670, %v667
    %v698 = vpack.c.bf16 %v675, %v675
    %v699 = vlaneseq
    %v700 = vshrl.u32 %v699, 7
    %v701 = vsub.s32 6, %v700
    %v702 = vrot.slane %v41, %v701
    %v719 = vunpack.c.l.b16 %v681
    %v720 = vunpack.c.l.b16 %v682
    %v721 = vunpack.c.l.b16 %v683
    %v722 = vunpack.c.l.b16 %v684
    %v723 = vunpack.c.l.b16 %v685
    %v724 = vunpack.c.l.b16 %v686
    %v725 = vunpack.c.l.b16 %v687
    %v726 = vunpack.c.l.b16 %v688
    %v727 = vunpack.c.l.b16 %v689
    %v728 = vunpack.c.l.b16 %v690
    %v729 = vunpack.c.l.b16 %v691
    %v730 = vunpack.c.l.b16 %v692
    %v731 = vunpack.c.l.b16 %v693
    %v732 = vunpack.c.l.b16 %v694
    %v733 = vunpack.c.l.b16 %v695
    %v734 = vunpack.c.l.b16 %v696
    %v735 = vpack.c.b16 %v720, %v719
    %v736 = vpack.c.b16 %v722, %v721
    %v737 = vpack.c.b16 %v724, %v723
    %v738 = vpack.c.b16 %v726, %v725
    %v739 = vpack.c.b16 %v728, %v727
    %v740 = vpack.c.b16 %v730, %v729
    %v741 = vpack.c.b16 %v732, %v731
    %v742 = vpack.c.b16 %v734, %v733
    %751 = vmatprep.subr.bf16.mxu0 0
    %752 = vmatpush1.bf16.msra.mxu0 %v735
    %753 = vmatprep.subr.bf16.mxu0 0
    %754 = vmatpush1.bf16.msra.mxu0 %v736
    %755 = vmatprep.subr.bf16.mxu0 0
    %756 = vmatpush1.bf16.msra.mxu0 %v737
    %757 = vmatprep.subr.bf16.mxu0 0
    %758 = vmatpush1.bf16.msra.mxu0 %v738
    %759 = vmatprep.subr.bf16.mxu0 0
    %760 = vmatpush1.bf16.msra.mxu0 %v739
    %761 = vmatprep.subr.bf16.mxu0 0
    %762 = vmatpush1.bf16.msra.mxu0 %v740
    %763 = vmatprep.subr.bf16.mxu0 0
    %764 = vmatpush1.bf16.msra.mxu0 %v741
    %765 = vmatprep.subr.bf16.mxu0 0
    %766 = vmatpush1.bf16.msra.mxu0 %v742
    %767 = vmatprep.subr.bf16.mxu0 0
    %768 = vmatpush1.bf16.msra.mxu0 0
    %769 = vmatprep.subr.bf16.mxu0 0
    %770 = vmatpush1.bf16.msra.mxu0 0
    %771 = vmatprep.subr.bf16.mxu0 0
    %772 = vmatpush1.bf16.msra.mxu0 0
    %773 = vmatprep.subr.bf16.mxu0 0
    %774 = vmatpush1.bf16.msra.mxu0 0
    %775 = vmatprep.subr.bf16.mxu0 0
    %776 = vmatpush1.bf16.msra.mxu0 0
    %777 = vmatprep.subr.bf16.mxu0 0
    %778 = vmatpush1.bf16.msra.mxu0 0
    %779 = vmatprep.subr.bf16.mxu0 0
    %780 = vmatpush1.bf16.msra.mxu0 0
    %781 = vmatprep.subr.bf16.mxu0 0
    %782 = vmatpush1.bf16.msra.mxu0 0
    %783 = vmatprep.mubr.bf16.mxu0 0
    %784 = vmatmul.mubr.bf16.gmra.mrb[0].mxu0 %v697
    %v785 = vpop.f32.mrb[0].mxu0
    %v786 = vadd.f32 %v702, %v785
    %v787 = vpop.f32.mrb[0].mxu0
    %v788 = vpop.f32.mrb[0].mxu0
    %v789 = vadd.f32 %v702, %v788
    %v790 = vpop.f32.mrb[0].mxu0
    %791 = vmatprep.mubr.bf16.mxu0 0
    %792 = vmatmul.mubr.bf16.gmra.mrb[0].mxu0 %v698
    %v793 = vpop.f32.mrb[0].mxu0
    %v794 = vadd.f32 %v702, %v793
    %v795 = vpop.f32.mrb[0].mxu0
    %v796 = vpop.f32.mrb[0].mxu0
    %v797 = vpop.f32.mrb[0].mxu0
    %798 = vdwg.mxu0
    %v799 = vadd.f32 %v174, %v786
    %v800 = vadd.f32 %v175, %v789
    %v801 = vadd.f32 %v176, %v794
    %802 = vadd.xlane.f32.xlu0 %v799
    %v803 = vpop.xlane.xlu0 %802
    %804 = vadd.xlane.f32.xlu0 %v800
    %v805 = vpop.xlane.xlu0 %804
    %806 = vadd.xlane.f32.xlu0 %v801
    %v807 = vpop.xlane.xlu0 %806
    %v808 = vmul.f32 %v803, %v132
    %v809 = vmul.f32 %v805, %v132
    %v810 = vmul.f32 %v807, %v132
    %v811 = vsub.f32 %v799, %v808
    %v812 = vsub.f32 %v800, %v809
    %v813 = vsub.f32 %v801, %v810
    %v814 = vmul.f32 %v811, %v811
    %v815 = vmul.f32 %v812, %v812
    %v816 = vmul.f32 %v813, %v813
    %817 = vadd.xlane.f32.xlu0 %v814
    %v818 = vpop.xlane.xlu0 %817
    %819 = vadd.xlane.f32.xlu0 %v815
    %v820 = vpop.xlane.xlu0 %819
    %821 = vadd.xlane.f32.xlu0 %v816
    %v822 = vpop.xlane.xlu0 %821
    %v823 = vmul.f32 %v818, %v132
    %v824 = vmul.f32 %v820, %v132
    %v825 = vmul.f32 %v822, %v132
    %v826 = vadd.f32 %v823, 1e-05
    %v827 = vadd.f32 %v824, 1e-05
    %v828 = vadd.f32 %v825, 1e-05
    %v829 = vrsqrt.pop %v826
    %v830 = vrsqrt.pop %v827
    %v831 = vrsqrt.pop %v828
    %v832 = vmul.f32 %v811, %v829
    %v833 = vmul.f32 %v812, %v830
    %v834 = vmul.f32 %v813, %v831
    %v835 = vlaneseq
    %v836 = vshrl.u32 %v835, 7
    %v837 = vsub.s32 0, %v836
    %v838 = vrot.slane %v42, %v837
    %v839 = vmul.f32 %v832, %v838
    %v840 = vmul.f32 %v833, %v838
    %v841 = vmul.f32 %v834, %v838
    %v842 = vlaneseq
    %v843 = vshrl.u32 %v842, 7
    %v844 = vsub.s32 1, %v843
    %v845 = vrot.slane %v42, %v844
    %v846 = vadd.f32 %v839, %v845
    %v847 = vadd.f32 %v840, %v845
    %v848 = vadd.f32 %v841, %v845
    %v849 = vpack.c.bf16 %v847, %v846
    %v850 = vpack.c.bf16 %v848, %v848
    %s851 = scalar_lea.vmem [#allocation2], 256
    %v852 = vld [vmem:[%s851] sm:$0xf]
    %v853 = vld [vmem:[%s851 + $0x4] sm:$0xf]
    %v854 = vld [vmem:[%s851 + $0x8] sm:$0xf]
    %v855 = vld [vmem:[%s851 + $0xc] sm:$0xf]
    %v856 = vld [vmem:[%s851 + $0x10] sm:$0xf]
    %v857 = vld [vmem:[%s851 + $0x14] sm:$0xf]
    %v858 = vld [vmem:[%s851 + $0x18] sm:$0xf]
    %v859 = vld [vmem:[%s851 + $0x1c] sm:$0xf]
    %v860 = vld [vmem:[%s851 + $0x20] sm:$0xf]
    %v861 = vld [vmem:[%s851 + $0x24] sm:$0xf]
    %v862 = vld [vmem:[%s851 + $0x28] sm:$0xf]
    %v863 = vld [vmem:[%s851 + $0x2c] sm:$0xf]
    %v864 = vld [vmem:[%s851 + $0x30] sm:$0xf]
    %v865 = vld [vmem:[%s851 + $0x34] sm:$0xf]
    %v866 = vld [vmem:[%s851 + $0x38] sm:$0xf]
    %v867 = vld [vmem:[%s851 + $0x3c] sm:$0xf]
    %v868 = vlaneseq
    %v869 = vshrl.u32 %v868, 7
    %v870 = vsub.s32 2, %v869
    %v871 = vrot.slane %v42, %v870
    %v888 = vunpack.c.l.b16 %v852
    %v889 = vunpack.c.l.b16 %v853
    %v890 = vunpack.c.l.b16 %v854
    %v891 = vunpack.c.l.b16 %v855
    %v892 = vunpack.c.l.b16 %v856
    %v893 = vunpack.c.l.b16 %v857
    %v894 = vunpack.c.l.b16 %v858
    %v895 = vunpack.c.l.b16 %v859
    %v896 = vunpack.c.l.b16 %v860
    %v897 = vunpack.c.l.b16 %v861
    %v898 = vunpack.c.l.b16 %v862
    %v899 = vunpack.c.l.b16 %v863
    %v900 = vunpack.c.l.b16 %v864
    %v901 = vunpack.c.l.b16 %v865
    %v902 = vunpack.c.l.b16 %v866
    %v903 = vunpack.c.l.b16 %v867
    %v904 = vpack.c.b16 %v889, %v888
    %v905 = vpack.c.b16 %v891, %v890
    %v906 = vpack.c.b16 %v893, %v892
    %v907 = vpack.c.b16 %v895, %v894
    %v908 = vpack.c.b16 %v897, %v896
    %v909 = vpack.c.b16 %v899, %v898
    %v910 = vpack.c.b16 %v901, %v900
    %v911 = vpack.c.b16 %v903, %v902
    %920 = vmatprep.subr.bf16.mxu0 0
    %921 = vmatpush1.bf16.msra.mxu0 %v904
    %922 = vmatprep.subr.bf16.mxu0 0
    %923 = vmatpush1.bf16.msra.mxu0 %v905
    %924 = vmatprep.subr.bf16.mxu0 0
    %925 = vmatpush1.bf16.msra.mxu0 %v906
    %926 = vmatprep.subr.bf16.mxu0 0
    %927 = vmatpush1.bf16.msra.mxu0 %v907
    %928 = vmatprep.subr.bf16.mxu0 0
    %929 = vmatpush1.bf16.msra.mxu0 %v908
    %930 = vmatprep.subr.bf16.mxu0 0
    %931 = vmatpush1.bf16.msra.mxu0 %v909
    %932 = vmatprep.subr.bf16.mxu0 0
    %933 = vmatpush1.bf16.msra.mxu0 %v910
    %934 = vmatprep.subr.bf16.mxu0 0
    %935 = vmatpush1.bf16.msra.mxu0 %v911
    %936 = vmatprep.subr.bf16.mxu0 0
    %937 = vmatpush1.bf16.msra.mxu0 0
    %938 = vmatprep.subr.bf16.mxu0 0
    %939 = vmatpush1.bf16.msra.mxu0 0
    %940 = vmatprep.subr.bf16.mxu0 0
    %941 = vmatpush1.bf16.msra.mxu0 0
    %942 = vmatprep.subr.bf16.mxu0 0
    %943 = vmatpush1.bf16.msra.mxu0 0
    %944 = vmatprep.subr.bf16.mxu0 0
    %945 = vmatpush1.bf16.msra.mxu0 0
    %946 = vmatprep.subr.bf16.mxu0 0
    %947 = vmatpush1.bf16.msra.mxu0 0
    %948 = vmatprep.subr.bf16.mxu0 0
    %949 = vmatpush1.bf16.msra.mxu0 0
    %950 = vmatprep.subr.bf16.mxu0 0
    %951 = vmatpush1.bf16.msra.mxu0 0
    %952 = vmatprep.mubr.bf16.mxu0 0
    %953 = vmatmul.mubr.bf16.gmra.mrb[0].mxu0 %v849
    %v954 = vpop.f32.mrb[0].mxu0
    %v955 = vadd.f32 %v871, %v954
    %v956 = vpop.f32.mrb[0].mxu0
    %v957 = vpop.f32.mrb[0].mxu0
    %v958 = vadd.f32 %v871, %v957
    %v959 = vpop.f32.mrb[0].mxu0
    %960 = vmatprep.mubr.bf16.mxu0 0
    %961 = vmatmul.mubr.bf16.gmra.mrb[0].mxu0 %v850
    %v962 = vpop.f32.mrb[0].mxu0
    %v963 = vadd.f32 %v871, %v962
    %v964 = vpop.f32.mrb[0].mxu0
    %v965 = vpop.f32.mrb[0].mxu0
    %v966 = vpop.f32.mrb[0].mxu0
    %967 = vdwg.mxu0
    %v968 = vmax.f32 %v955, 0.0
    %v969 = vmax.f32 %v958, 0.0
    %v970 = vmax.f32 %v963, 0.0
    %s971 = scalar_lea.vmem [#allocation2], 320
    %v972 = vld [vmem:[%s971] sm:$0xf]
    %v973 = vld [vmem:[%s971 + $0x4] sm:$0xf]
    %v974 = vld [vmem:[%s971 + $0x8] sm:$0xf]
    %v975 = vld [vmem:[%s971 + $0xc] sm:$0xf]
    %v976 = vld [vmem:[%s971 + $0x10] sm:$0xf]
    %v977 = vld [vmem:[%s971 + $0x14] sm:$0xf]
    %v978 = vld [vmem:[%s971 + $0x18] sm:$0xf]
    %v979 = vld [vmem:[%s971 + $0x1c] sm:$0xf]
    %v980 = vld [vmem:[%s971 + $0x20] sm:$0xf]
    %v981 = vld [vmem:[%s971 + $0x24] sm:$0xf]
    %v982 = vld [vmem:[%s971 + $0x28] sm:$0xf]
    %v983 = vld [vmem:[%s971 + $0x2c] sm:$0xf]
    %v984 = vld [vmem:[%s971 + $0x30] sm:$0xf]
    %v985 = vld [vmem:[%s971 + $0x34] sm:$0xf]
    %v986 = vld [vmem:[%s971 + $0x38] sm:$0xf]
    %v987 = vld [vmem:[%s971 + $0x3c] sm:$0xf]
    %v988 = vpack.c.bf16 %v969, %v968
    %v989 = vpack.c.bf16 %v970, %v970
    %v990 = vlaneseq
    %v991 = vshrl.u32 %v990, 7
    %v992 = vsub.s32 3, %v991
    %v993 = vrot.slane %v42, %v992
    %v1010 = vunpack.c.l.b16 %v972
    %v1011 = vunpack.c.l.b16 %v973
    %v1012 = vunpack.c.l.b16 %v974
    %v1013 = vunpack.c.l.b16 %v975
    %v1014 = vunpack.c.l.b16 %v976
    %v1015 = vunpack.c.l.b16 %v977
    %v1016 = vunpack.c.l.b16 %v978
    %v1017 = vunpack.c.l.b16 %v979
    %v1018 = vunpack.c.l.b16 %v980
    %v1019 = vunpack.c.l.b16 %v981
    %v1020 = vunpack.c.l.b16 %v982
    %v1021 = vunpack.c.l.b16 %v983
    %v1022 = vunpack.c.l.b16 %v984
    %v1023 = vunpack.c.l.b16 %v985
    %v1024 = vunpack.c.l.b16 %v986
    %v1025 = vunpack.c.l.b16 %v987
    %v1026 = vpack.c.b16 %v1011, %v1010
    %v1027 = vpack.c.b16 %v1013, %v1012
    %v1028 = vpack.c.b16 %v1015, %v1014
    %v1029 = vpack.c.b16 %v1017, %v1016
    %v1030 = vpack.c.b16 %v1019, %v1018
    %v1031 = vpack.c.b16 %v1021, %v1020
    %v1032 = vpack.c.b16 %v1023, %v1022
    %v1033 = vpack.c.b16 %v1025, %v1024
    %1042 = vmatprep.subr.bf16.mxu0 0
    %1043 = vmatpush1.bf16.msra.mxu0 %v1026
    %1044 = vmatprep.subr.bf16.mxu0 0
    %1045 = vmatpush1.bf16.msra.mxu0 %v1027
    %1046 = vmatprep.subr.bf16.mxu0 0
    %1047 = vmatpush1.bf16.msra.mxu0 %v1028
    %1048 = vmatprep.subr.bf16.mxu0 0
    %1049 = vmatpush1.bf16.msra.mxu0 %v1029
    %1050 = vmatprep.subr.bf16.mxu0 0
    %1051 = vmatpush1.bf16.msra.mxu0 %v1030
    %1052 = vmatprep.subr.bf16.mxu0 0
    %1053 = vmatpush1.bf16.msra.mxu0 %v1031
    %1054 = vmatprep.subr.bf16.mxu0 0
    %1055 = vmatpush1.bf16.msra.mxu0 %v1032
    %1056 = vmatprep.subr.bf16.mxu0 0
    %1057 = vmatpush1.bf16.msra.mxu0 %v1033
    %1058 = vmatprep.subr.bf16.mxu0 0
    %1059 = vmatpush1.bf16.msra.mxu0 0
    %1060 = vmatprep.subr.bf16.mxu0 0
    %1061 = vmatpush1.bf16.msra.mxu0 0
    %1062 = vmatprep.subr.bf16.mxu0 0
    %1063 = vmatpush1.bf16.msra.mxu0 0
    %1064 = vmatprep.subr.bf16.mxu0 0
    %1065 = vmatpush1.bf16.msra.mxu0 0
    %1066 = vmatprep.subr.bf16.mxu0 0
    %1067 = vmatpush1.bf16.msra.mxu0 0
    %1068 = vmatprep.subr.bf16.mxu0 0
    %1069 = vmatpush1.bf16.msra.mxu0 0
    %1070 = vmatprep.subr.bf16.mxu0 0
    %1071 = vmatpush1.bf16.msra.mxu0 0
    %1072 = vmatprep.subr.bf16.mxu0 0
    %1073 = vmatpush1.bf16.msra.mxu0 0
    %1074 = vmatprep.mubr.bf16.mxu0 0
    %1075 = vmatmul.mubr.bf16.gmra.mrb[0].mxu0 %v988
    %v1076 = vpop.f32.mrb[0].mxu0
    %v1077 = vadd.f32 %v993, %v1076
    %v1078 = vpop.f32.mrb[0].mxu0
    %v1079 = vpop.f32.mrb[0].mxu0
    %v1080 = vadd.f32 %v993, %v1079
    %v1081 = vpop.f32.mrb[0].mxu0
    %1082 = vmatprep.mubr.bf16.mxu0 0
    %1083 = vmatmul.mubr.bf16.gmra.mrb[0].mxu0 %v989
    %v1084 = vpop.f32.mrb[0].mxu0
    %v1085 = vadd.f32 %v993, %v1084
    %v1086 = vpop.f32.mrb[0].mxu0
    %v1087 = vpop.f32.mrb[0].mxu0
    %v1088 = vpop.f32.mrb[0].mxu0
    %1089 = vdwg.mxu0
    %v1090 = vadd.f32 %v846, %v1077
    %v1091 = vadd.f32 %v847, %v1080
    %v1092 = vadd.f32 %v848, %v1085
    %1093 = vadd.xlane.f32.xlu0 %v1090
    %v1094 = vpop.xlane.xlu0 %1093
    %1095 = vadd.xlane.f32.xlu0 %v1091
    %v1096 = vpop.xlane.xlu0 %1095
    %1097 = vadd.xlane.f32.xlu0 %v1092
    %v1098 = vpop.xlane.xlu0 %1097
    %v1099 = vmul.f32 %v1094, %v132
    %v1100 = vmul.f32 %v1096, %v132
    %v1101 = vmul.f32 %v1098, %v132
    %v1102 = vsub.f32 %v1090, %v1099
    %v1103 = vsub.f32 %v1091, %v1100
    %v1104 = vsub.f32 %v1092, %v1101
    %v1105 = vmul.f32 %v1102, %v1102
    %v1106 = vmul.f32 %v1103, %v1103
    %v1107 = vmul.f32 %v1104, %v1104
    %1108 = vadd.xlane.f32.xlu0 %v1105
    %v1109 = vpop.xlane.xlu0 %1108
    %1110 = vadd.xlane.f32.xlu0 %v1106
    %v1111 = vpop.xlane.xlu0 %1110
    %1112 = vadd.xlane.f32.xlu0 %v1107
    %v1113 = vpop.xlane.xlu0 %1112
    %v1114 = vmul.f32 %v1109, %v132
    %v1115 = vmul.f32 %v1111, %v132
    %v1116 = vmul.f32 %v1113, %v132
    %v1117 = vadd.f32 %v1114, 1e-05
    %v1118 = vadd.f32 %v1115, 1e-05
    %v1119 = vadd.f32 %v1116, 1e-05
    %v1120 = vrsqrt.pop %v1117
    %v1121 = vrsqrt.pop %v1118
    %v1122 = vrsqrt.pop %v1119
    %v1123 = vmul.f32 %v1102, %v1120
    %v1124 = vmul.f32 %v1103, %v1121
    %v1125 = vmul.f32 %v1104, %v1122
    %v1126 = vlaneseq
    %v1127 = vshrl.u32 %v1126, 7
    %v1128 = vsub.s32 4, %v1127
    %v1129 = vrot.slane %v42, %v1128
    %v1130 = vmul.f32 %v1123, %v1129
    %v1131 = vmul.f32 %v1124, %v1129
    %v1132 = vmul.f32 %v1125, %v1129
    %v1133 = vlaneseq
    %v1134 = vshrl.u32 %v1133, 7
    %v1135 = vsub.s32 5, %v1134
    %v1136 = vrot.slane %v42, %v1135
    %v1137 = vadd.f32 %v1130, %v1136
    %v1138 = vadd.f32 %v1131, %v1136
    %v1139 = vadd.f32 %v1132, %v1136
    %v1140 = vpack.c.bf16 %v1138, %v1137
    %v1141 = vpack.c.bf16 %v1139, %v1139
    %v1142 = vld [vmem:[%s5] sm:$0x7]
    %v1144 = vsel %vm584, %v1142, 0
    %v1147 = vsel %vm628, %v1141, 0
    %1149 = vmatprep.subr.bf16.mxu0 0
    %1150 = vmatpush1.bf16.msra.mxu0 %v1140
    %1151 = vmatprep.subr.bf16.mxu0 0
    %1152 = vmatpush1.bf16.msra.mxu0 %v1147
    %1153 = vmatprep.subr.bf16.mxu0 0
    %1154 = vmatpush1.bf16.msra.mxu0 0
    %1155 = vmatprep.subr.bf16.mxu0 0
    %1156 = vmatpush1.bf16.msra.mxu0 0
    %1157 = vmatprep.subr.bf16.mxu0 0
    %1158 = vmatpush1.bf16.msra.mxu0 0
    %1159 = vmatprep.subr.bf16.mxu0 0
    %1160 = vmatpush1.bf16.msra.mxu0 0
    %1161 = vmatprep.subr.bf16.mxu0 0
    %1162 = vmatpush1.bf16.msra.mxu0 0
    %1163 = vmatprep.subr.bf16.mxu0 0
    %1164 = vmatpush1.bf16.msra.mxu0 0
    %1165 = vmatprep.subr.bf16.mxu0 0
    %1166 = vmatpush1.bf16.msra.mxu0 0
    %1167 = vmatprep.subr.bf16.mxu0 0
    %1168 = vmatpush1.bf16.msra.mxu0 0
    %1169 = vmatprep.subr.bf16.mxu0 0
    %1170 = vmatpush1.bf16.msra.mxu0 0
    %1171 = vmatprep.subr.bf16.mxu0 0
    %1172 = vmatpush1.bf16.msra.mxu0 0
    %1173 = vmatprep.subr.bf16.mxu0 0
    %1174 = vmatpush1.bf16.msra.mxu0 0
    %1175 = vmatprep.subr.bf16.mxu0 0
    %1176 = vmatpush1.bf16.msra.mxu0 0
    %1177 = vmatprep.subr.bf16.mxu0 0
    %1178 = vmatpush1.bf16.msra.mxu0 0
    %1179 = vmatprep.subr.bf16.mxu0 0
    %1180 = vmatpush1.bf16.msra.mxu0 0
    %1181 = vmatprep.mubr.bf16.mxu0 0
    %1182 = vmatmul.mubr.bf16.gmra.mrb[0].mxu0 %v1144
    %v1183 = vpop.f32.mrb[0].mxu0
    %v1184 = vadd.f32 0.0, %v1183
    %v1185 = vpop.f32.mrb[0].mxu0
    %v1186 = vpop.f32.mrb[0].mxu0
    %v1187 = vpop.f32.mrb[0].mxu0
    %1188 = vdwg.mxu0
    %s1189 = scalar_lea.vmem %s5, 4
    %v1190 = vld [vmem:[%s1189] sm:$0x7]
    %v1192 = vsel %vm584, %v1190, 0
    %1194 = vmatprep.subr.bf16.mxu0 0
    %1195 = vmatpush1.bf16.msra.mxu0 %v1140
    %1196 = vmatprep.subr.bf16.mxu0 0
    %1197 = vmatpush1.bf16.msra.mxu0 %v1147
    %1198 = vmatprep.subr.bf16.mxu0 0
    %1199 = vmatpush1.bf16.msra.mxu0 0
    %1200 = vmatprep.subr.bf16.mxu0 0
    %1201 = vmatpush1.bf16.msra.mxu0 0
    %1202 = vmatprep.subr.bf16.mxu0 0
    %1203 = vmatpush1.bf16.msra.mxu0 0
    %1204 = vmatprep.subr.bf16.mxu0 0
    %1205 = vmatpush1.bf16.msra.mxu0 0
    %1206 = vmatprep.subr.bf16.mxu0 0
    %1207 = vmatpush1.bf16.msra.mxu0 0
    %1208 = vmatprep.subr.bf16.mxu0 0
    %1209 = vmatpush1.bf16.msra.mxu0 0
    %1210 = vmatprep.subr.bf16.mxu0 0
    %1211 = vmatpush1.bf16.msra.mxu0 0
    %1212 = vmatprep.subr.bf16.mxu0 0
    %1213 = vmatpush1.bf16.msra.mxu0 0
    %1214 = vmatprep.subr.bf16.mxu0 0
    %1215 = vmatpush1.bf16.msra.mxu0 0
    %1216 = vmatprep.subr.bf16.mxu0 0
    %1217 = vmatpush1.bf16.msra.mxu0 0
    %1218 = vmatprep.subr.bf16.mxu0 0
    %1219 = vmatpush1.bf16.msra.mxu0 0
    %1220 = vmatprep.subr.bf16.mxu0 0
    %1221 = vmatpush1.bf16.msra.mxu0 0
    %1222 = vmatprep.subr.bf16.mxu0 0
    %1223 = vmatpush1.bf16.msra.mxu0 0
    %1224 = vmatprep.subr.bf16.mxu0 0
    %1225 = vmatpush1.bf16.msra.mxu0 0
    %1226 = vmatprep.mubr.bf16.mxu0 0
    %1227 = vmatmul.mubr.bf16.gmra.mrb[0].mxu0 %v1192
    %v1228 = vpop.f32.mrb[0].mxu0
    %v1229 = vadd.f32 0.0, %v1228
    %v1230 = vpop.f32.mrb[0].mxu0
    %v1231 = vpop.f32.mrb[0].mxu0
    %v1232 = vpop.f32.mrb[0].mxu0
    %1233 = vdwg.mxu0
    %v1234 = vmax.f32 %v1184, %v1229
    %s1235 = scalar_lea.vmem %s5, 8
    %v1236 = vld [vmem:[%s1235] sm:$0x7]
    %v1238 = vsel %vm584, %v1236, 0
    %1240 = vmatprep.subr.bf16.mxu0 0
    %1241 = vmatpush1.bf16.msra.mxu0 %v1140
    %1242 = vmatprep.subr.bf16.mxu0 0
    %1243 = vmatpush1.bf16.msra.mxu0 %v1147
    %1244 = vmatprep.subr.bf16.mxu0 0
    %1245 = vmatpush1.bf16.msra.mxu0 0
    %1246 = vmatprep.subr.bf16.mxu0 0
    %1247 = vmatpush1.bf16.msra.mxu0 0
    %1248 = vmatprep.subr.bf16.mxu0 0
    %1249 = vmatpush1.bf16.msra.mxu0 0
    %1250 = vmatprep.subr.bf16.mxu0 0
    %1251 = vmatpush1.bf16.msra.mxu0 0
    %1252 = vmatprep.subr.bf16.mxu0 0
    %1253 = vmatpush1.bf16.msra.mxu0 0
    %1254 = vmatprep.subr.bf16.mxu0 0
    %1255 = vmatpush1.bf16.msra.mxu0 0
    %1256 = vmatprep.subr.bf16.mxu0 0
    %1257 = vmatpush1.bf16.msra.mxu0 0
    %1258 = vmatprep.subr.bf16.mxu0 0
    %1259 = vmatpush1.bf16.msra.mxu0 0
    %1260 = vmatprep.subr.bf16.mxu0 0
    %1261 = vmatpush1.bf16.msra.mxu0 0
    %1262 = vmatprep.subr.bf16.mxu0 0
    %1263 = vmatpush1.bf16.msra.mxu0 0
    %1264 = vmatprep.subr.bf16.mxu0 0
    %1265 = vmatpush1.bf16.msra.mxu0 0
    %1266 = vmatprep.subr.bf16.mxu0 0
    %1267 = vmatpush1.bf16.msra.mxu0 0
    %1268 = vmatprep.subr.bf16.mxu0 0
    %1269 = vmatpush1.bf16.msra.mxu0 0
    %1270 = vmatprep.subr.bf16.mxu0 0
    %1271 = vmatpush1.bf16.msra.mxu0 0
    %1272 = vmatprep.mubr.bf16.mxu0 0
    %1273 = vmatmul.mubr.bf16.gmra.mrb[0].mxu0 %v1238
    %v1274 = vpop.f32.mrb[0].mxu0
    %v1275 = vadd.f32 0.0, %v1274
    %v1276 = vpop.f32.mrb[0].mxu0
    %v1277 = vpop.f32.mrb[0].mxu0
    %v1278 = vpop.f32.mrb[0].mxu0
    %1279 = vdwg.mxu0
    %v1280 = vmax.f32 %v1234, %v1275
    %s1281 = scalar_lea.vmem %s5, 12
    %v1282 = vld [vmem:[%s1281] sm:$0x7]
    %v1284 = vsel %vm584, %v1282, 0
    %1286 = vmatprep.subr.bf16.mxu0 0
    %1287 = vmatpush1.bf16.msra.mxu0 %v1140
    %1288 = vmatprep.subr.bf16.mxu0 0
    %1289 = vmatpush1.bf16.msra.mxu0 %v1147
    %1290 = vmatprep.subr.bf16.mxu0 0
    %1291 = vmatpush1.bf16.msra.mxu0 0
    %1292 = vmatprep.subr.bf16.mxu0 0
    %1293 = vmatpush1.bf16.msra.mxu0 0
    %1294 = vmatprep.subr.bf16.mxu0 0
    %1295 = vmatpush1.bf16.msra.mxu0 0
    %1296 = vmatprep.subr.bf16.mxu0 0
    %1297 = vmatpush1.bf16.msra.mxu0 0
    %1298 = vmatprep.subr.bf16.mxu0 0
    %1299 = vmatpush1.bf16.msra.mxu0 0
    %1300 = vmatprep.subr.bf16.mxu0 0
    %1301 = vmatpush1.bf16.msra.mxu0 0
    %1302 = vmatprep.subr.bf16.mxu0 0
    %1303 = vmatpush1.bf16.msra.mxu0 0
    %1304 = vmatprep.subr.bf16.mxu0 0
    %1305 = vmatpush1.bf16.msra.mxu0 0
    %1306 = vmatprep.subr.bf16.mxu0 0
    %1307 = vmatpush1.bf16.msra.mxu0 0
    %1308 = vmatprep.subr.bf16.mxu0 0
    %1309 = vmatpush1.bf16.msra.mxu0 0
    %1310 = vmatprep.subr.bf16.mxu0 0
    %1311 = vmatpush1.bf16.msra.mxu0 0
    %1312 = vmatprep.subr.bf16.mxu0 0
    %1313 = vmatpush1.bf16.msra.mxu0 0
    %1314 = vmatprep.subr.bf16.mxu0 0
    %1315 = vmatpush1.bf16.msra.mxu0 0
    %1316 = vmatprep.subr.bf16.mxu0 0
    %1317 = vmatpush1.bf16.msra.mxu0 0
    %1318 = vmatprep.mubr.bf16.mxu0 0
    %1319 = vmatmul.mubr.bf16.gmra.mrb[0].mxu0 %v1284
    %v1320 = vpop.f32.mrb[0].mxu0
    %v1321 = vadd.f32 0.0, %v1320
    %v1322 = vpop.f32.mrb[0].mxu0
    %v1323 = vpop.f32.mrb[0].mxu0
    %v1324 = vpop.f32.mrb[0].mxu0
    %1325 = vdwg.mxu0
    %v1326 = vmax.f32 %v1280, %v1321
    %1327 = vst [vmem:[%s6] sm:$0x3f] %v1326
    // Predicated region
    $region30: #{at_forward.1} parent=1 // pred_check
      _
    $region31: #{at_forward.1} parent=1 // pred_check_branch
      %1329 = sbr.rel (0) target = $region33
    $region32: #{at_forward.1} parent=1 // pred_region
      _
    $region33: #{at_forward.1} parent=1 // pred_fallthru
      _
    // Predicated region
    $region34: #{at_forward.1} parent=1 // pred_check
      _
    $region35: #{at_forward.1} parent=1 // pred_check_branch
      %1331 = sbr.rel (0) target = $region37
    $region36: #{at_forward.1} parent=1 // pred_region
      _
    $region37: #{at_forward.1} parent=1 // pred_fallthru
      _
    %1332 = vsyncpa [#allocation3], 1

</llo_original>
